<compile_context>
chip_gen: v7x
topology: tpu7x:2x2x1
jax: 0.10.0
libtpu: 0.0.40
codegen_flags: <defaults>
</compile_context>

<pallas_src>
import jax
import jax.numpy as jnp
from jax import lax
from jax.experimental import pallas as pl
from jax.experimental.pallas import tpu as pltpu


def lstm_kernel(x_ref, wih_ref, whh_ref, b_ref, wfc_ref, bfc_ref,
                out_ref, h_ref, c_ref, gx_ref):
    # x_ref:   (T, Bb, E_pad)      bf16
    # wih_ref: (E_pad, 4*H_pad)    bf16
    # whh_ref: (H_pad, 4*H_pad)    bf16
    # b_ref:   (1, 4*H_pad)        f32   (b_ih + b_hh combined)
    # wfc_ref: (H_pad, O_pad)      bf16
    # bfc_ref: (1, O_pad)          f32
    # out_ref: (Bb, O_pad)         f32
    # h_ref, c_ref: (Bb, H_pad)    f32 scratch (recurrent state)
    # gx_ref:  (T, Bb, 4*H_pad)    f32 scratch (precomputed input projection)
    T, Bb, E = x_ref.shape
    H = h_ref.shape[1]

    # ---- hoisted input projection: one big MXU matmul + bias, off the
    # serial critical path (replaces T tiny (Bb,E)x(E,4H) matmuls) ----
    x_flat = x_ref[...].reshape(T * Bb, E)
    gx = jnp.dot(x_flat, wih_ref[...], preferred_element_type=jnp.float32)
    gx_ref[...] = (gx + b_ref[...]).reshape(T, Bb, 4 * H)

    # loop-invariant weight load hoisted out of the recurrence
    w_hh = whh_ref[...]

    h_ref[...] = jnp.zeros_like(h_ref)
    c_ref[...] = jnp.zeros_like(c_ref)

    def body(t, carry):
        # only the recurrent matmul remains on the serial path
        gates = gx_ref[t] + jnp.dot(h_ref[...].astype(w_hh.dtype), w_hh,
                                    preferred_element_type=jnp.float32)
        # lane-aligned gate slices (H == H_pad == multiple of 128)
        i_g = jax.nn.sigmoid(gates[:, 0:H])
        f_g = jax.nn.sigmoid(gates[:, H:2 * H])
        g_g = jnp.tanh(gates[:, 2 * H:3 * H])
        o_g = jax.nn.sigmoid(gates[:, 3 * H:4 * H])
        c_new = f_g * c_ref[...] + i_g * g_g
        h_ref[...] = o_g * jnp.tanh(c_new)
        c_ref[...] = c_new
        return carry

    # fully unroll the short fixed-T recurrence for scheduler visibility
    lax.fori_loop(0, T, body, 0, unroll=True)

    # final fc on the last hidden state (== output[:, -1, :] of batch_first LSTM)
    out_ref[...] = (jnp.dot(h_ref[...].astype(wfc_ref.dtype), wfc_ref[...],
                            preferred_element_type=jnp.float32)
                    + bfc_ref[...]).astype(out_ref.dtype)


def _round_up(x, m):
    return (x + m - 1) // m * m


def lstm_forward(text, emb_table, w_ih, w_hh, bias, w_fc, b_fc):
    """text: (B, T) int32 token ids.  Returns (B, O) float32 logits.

    Weight layout (same as before): w_ih (E, 4H), w_hh (H, 4H) with PyTorch
    gate order [i | f | g | o]; bias = b_ih + b_hh; w_fc = Linear.weight.T.
    """
    B, T = text.shape
    V, E = emb_table.shape
    H = w_hh.shape[0]
    O = w_fc.shape[1]

    E_pad = _round_up(E, 128)
    H_pad = _round_up(H, 128)
    O_pad = _round_up(O, 128)
    block_b = min(_round_up(B, 8), 64)
    B_pad = _round_up(B, block_b)

    # ---- pad parameters per-gate to H_pad lanes (zero padding is exact:
    # padded gate pre-activations are 0 -> padded h/c lanes stay 0) ----
    wih_p = jnp.zeros((E_pad, 4, H_pad), jnp.float32)
    wih_p = wih_p.at[:E, :, :H].set(w_ih.reshape(E, 4, H))
    wih_p = wih_p.reshape(E_pad, 4 * H_pad).astype(jnp.bfloat16)

    whh_p = jnp.zeros((H_pad, 4, H_pad), jnp.float32)
    whh_p = whh_p.at[:H, :, :H].set(w_hh.reshape(H, 4, H))
    whh_p = whh_p.reshape(H_pad, 4 * H_pad).astype(jnp.bfloat16)

    b_p = jnp.zeros((4, H_pad), jnp.float32).at[:, :H].set(bias.reshape(4, H))
    b_p = b_p.reshape(1, 4 * H_pad)

    wfc_p = jnp.zeros((H_pad, O_pad), jnp.float32).at[:H, :O].set(w_fc)
    wfc_p = wfc_p.astype(jnp.bfloat16)
    bfc_p = jnp.zeros((1, O_pad), jnp.float32).at[0, :O].set(b_fc)

    # ---- embedding gather fused with the time-major transpose: transpose the
    # small int ids and gather straight into (T, B, E); no big activation
    # transpose pass over HBM ----
    text_p = jnp.zeros((B_pad, T), text.dtype).at[:B].set(text)
    x_tm = jnp.take(emb_table, text_p.T, axis=0)                  # (T, B_pad, E)
    x_tm = jnp.pad(x_tm, ((0, 0), (0, 0), (0, E_pad - E))).astype(jnp.bfloat16)

    grid = (B_pad // block_b,)
    out_p = pl.pallas_call(
        lstm_kernel,
        out_shape=jax.ShapeDtypeStruct((B_pad, O_pad), jnp.float32),
        grid_spec=pltpu.PrefetchScalarGridSpec(
            num_scalar_prefetch=0,
            grid=grid,
            in_specs=[
                pl.BlockSpec((T, block_b, E_pad), lambda b: (0, b, 0)),
                pl.BlockSpec((E_pad, 4 * H_pad), lambda b: (0, 0)),
                pl.BlockSpec((H_pad, 4 * H_pad), lambda b: (0, 0)),
                pl.BlockSpec((1, 4 * H_pad), lambda b: (0, 0)),
                pl.BlockSpec((H_pad, O_pad), lambda b: (0, 0)),
                pl.BlockSpec((1, O_pad), lambda b: (0, 0)),
            ],
            out_specs=pl.BlockSpec((block_b, O_pad), lambda b: (b, 0)),
            scratch_shapes=[
                pltpu.VMEM((block_b, H_pad), jnp.float32),          # h
                pltpu.VMEM((block_b, H_pad), jnp.float32),          # c
                pltpu.VMEM((T, block_b, 4 * H_pad), jnp.float32),   # gates_x
            ],
        ),
        compiler_params=pltpu.CompilerParams(
            dimension_semantics=("parallel",),
            vmem_limit_bytes=48 * 1024 * 1024,
        ),
    )(x_tm, wih_p, whh_p, b_p, wfc_p, bfc_p)

    return out_p[:B, :O]


def reference_forward(text, emb_table, w_ih, w_hh, bias, w_fc, b_fc):
    """Pure-JAX f32 reference mirroring torch nn.LSTM(batch_first=True) + Linear."""
    B, T = text.shape
    H = w_hh.shape[0]
    x = jnp.take(emb_table, text, axis=0)  # (B, T, E)
    h = jnp.zeros((B, H), jnp.float32)
    c = jnp.zeros((B, H), jnp.float32)
    for t in range(T):
        gates = x[:, t, :] @ w_ih + h @ w_hh + bias
        i_g = jax.nn.sigmoid(gates[:, 0:H])
        f_g = jax.nn.sigmoid(gates[:, H:2 * H])
        g_g = jnp.tanh(gates[:, 2 * H:3 * H])
        o_g = jax.nn.sigmoid(gates[:, 3 * H:4 * H])
        c = f_g * c + i_g * g_g
        h = o_g * jnp.tanh(c)
    return h @ w_fc + b_fc


if __name__ == "__main__":
    # small shapes consistent with the module's forward
    VOCAB, E, H, O = 16, 32, 32, 4
    B, T = 8, 8

    key = jax.random.PRNGKey(0)
    k_emb, k_wih, k_whh, k_b, k_wfc, k_bfc, k_txt = jax.random.split(key, 7)

    emb_table = jax.random.normal(k_emb, (VOCAB, E), jnp.float32) * 0.1
    emb_table = emb_table.at[0].set(0.0)  # padding_idx=0

    w_ih = jax.random.normal(k_wih, (E, 4 * H), jnp.float32) * 0.1   # (E, 4H)
    w_hh = jax.random.normal(k_whh, (H, 4 * H), jnp.float32) * 0.1   # (H, 4H)
    bias = jax.random.normal(k_b, (4 * H,), jnp.float32) * 0.1       # b_ih + b_hh
    w_fc = jax.random.normal(k_wfc, (H, O), jnp.float32) * 0.1       # Linear.weight.T
    b_fc = jax.random.normal(k_bfc, (O,), jnp.float32) * 0.1

    text = jax.random.randint(k_txt, (B, T), 0, VOCAB, dtype=jnp.int32)

    out = lstm_forward(text, emb_table, w_ih, w_hh, bias, w_fc, b_fc)
    out = jax.block_until_ready(out)

    ref = reference_forward(text, emb_table, w_ih, w_hh, bias, w_fc, b_fc)
    assert out.shape == (B, O)
    # tolerance loosened vs the f32 reference because matmul inputs are bf16
    # (accumulation and h/c state remain f32)
    assert jnp.allclose(out, ref, atol=2e-2, rtol=2e-2), "mismatch vs reference"

    print("KERNEL_OK")
</pallas_src>

<mosaic_0001>
module attributes {stable_mosaic.version = 11 : i64} {
  func.func @lstm_kernel(%arg0: i32, %arg1: memref<8x8x128xbf16, #tpu.memory_space<vmem>>, %arg2: memref<128x512xbf16, #tpu.memory_space<vmem>>, %arg3: memref<128x512xbf16, #tpu.memory_space<vmem>>, %arg4: memref<1x512xf32, #tpu.memory_space<vmem>>, %arg5: memref<128x128xbf16, #tpu.memory_space<vmem>>, %arg6: memref<1x128xf32, #tpu.memory_space<vmem>>, %arg7: memref<8x128xf32, #tpu.memory_space<vmem>>, %arg8: memref<8x128xf32, #tpu.memory_space<vmem>>, %arg9: memref<8x128xf32, #tpu.memory_space<vmem>>, %arg10: memref<8x8x512xf32, #tpu.memory_space<vmem>>) attributes {dimension_semantics = [#tpu.dimension_semantics<parallel>], iteration_bounds = array<i64: 1>, scalar_prefetch = 0 : i64, scratch_operands = 3 : i64, tpu.core_type = #tpu.core_type<tc>, window_params = [{transform_indices = @transform_0, window_bounds = array<i64: 8, 8, 128>}, {pipeline_mode = #tpu.pipeline_mode<synchronous>, transform_indices = @transform_1, window_bounds = array<i64: 128, 512>}, {pipeline_mode = #tpu.pipeline_mode<synchronous>, transform_indices = @transform_2, window_bounds = array<i64: 128, 512>}, {pipeline_mode = #tpu.pipeline_mode<synchronous>, transform_indices = @transform_3, window_bounds = array<i64: 1, 512>}, {pipeline_mode = #tpu.pipeline_mode<synchronous>, transform_indices = @transform_4, window_bounds = array<i64: 128, 128>}, {pipeline_mode = #tpu.pipeline_mode<synchronous>, transform_indices = @transform_5, window_bounds = array<i64: 1, 128>}, {transform_indices = @transform_6, window_bounds = array<i64: 8, 128>}]} {
    %c0 = arith.constant 0 : index
    %c0_0 = arith.constant 0 : index
    %c0_1 = arith.constant 0 : index
    %0 = vector.load %arg1[%c0, %c0_0, %c0_1] : memref<8x8x128xbf16, #tpu.memory_space<vmem>>, vector<8x8x128xbf16>
    %1 = vector.shape_cast %0 : vector<8x8x128xbf16> to vector<64x128xbf16>
    %c0_2 = arith.constant 0 : index
    %c0_3 = arith.constant 0 : index
    %2 = vector.load %arg2[%c0_2, %c0_3] : memref<128x512xbf16, #tpu.memory_space<vmem>>, vector<128x512xbf16>
    %cst = arith.constant dense<0.000000e+00> : vector<64x512xf32>
    %3 = tpu.matmul %1, %2, %cst {dimension_numbers = #tpu.dot_dimension_numbers<[1], [0], [0], [1], [0, 0, 1, 1], [], []>} : vector<64x128xbf16>, vector<128x512xbf16>, vector<64x512xf32> -> vector<64x512xf32>
    %c0_4 = arith.constant 0 : index
    %c0_5 = arith.constant 0 : index
    %4 = vector.load %arg4[%c0_4, %c0_5] : memref<1x512xf32, #tpu.memory_space<vmem>>, vector<1x512xf32>
    %5 = vector.broadcast %4 : vector<1x512xf32> to vector<64x512xf32>
    %6 = arith.addf %3, %5 : vector<64x512xf32>
    %7 = vector.shape_cast %6 : vector<64x512xf32> to vector<8x8x512xf32>
    %c0_6 = arith.constant 0 : index
    %c0_7 = arith.constant 0 : index
    %c0_8 = arith.constant 0 : index
    %8 = vector.load %arg10[%c0_6, %c0_7, %c0_8] : memref<8x8x512xf32, #tpu.memory_space<vmem>>, vector<8x8x512xf32>
    tpu.vector_store %arg10[%c0_6, %c0_7, %c0_8], %7 {strides = array<i32>} : memref<8x8x512xf32, #tpu.memory_space<vmem>>, vector<8x8x512xf32>,
    %c0_9 = arith.constant 0 : index
    %c0_10 = arith.constant 0 : index
    %9 = vector.load %arg3[%c0_9, %c0_10] : memref<128x512xbf16, #tpu.memory_space<vmem>>, vector<128x512xbf16>
    %cst_11 = arith.constant 0.000000e+00 : f32
    %10 = vector.broadcast %cst_11 : f32 to vector<8x128xf32>
    %c0_12 = arith.constant 0 : index
    %c0_13 = arith.constant 0 : index
    %11 = vector.load %arg8[%c0_12, %c0_13] : memref<8x128xf32, #tpu.memory_space<vmem>>, vector<8x128xf32>
    tpu.vector_store %arg8[%c0_12, %c0_13], %10 {strides = array<i32>} : memref<8x128xf32, #tpu.memory_space<vmem>>, vector<8x128xf32>,
    %cst_14 = arith.constant 0.000000e+00 : f32
    %12 = vector.broadcast %cst_14 : f32 to vector<8x128xf32>
    %c0_15 = arith.constant 0 : index
    %c0_16 = arith.constant 0 : index
    %13 = vector.load %arg9[%c0_15, %c0_16] : memref<8x128xf32, #tpu.memory_space<vmem>>, vector<8x128xf32>
    tpu.vector_store %arg9[%c0_15, %c0_16], %12 {strides = array<i32>} : memref<8x128xf32, #tpu.memory_space<vmem>>, vector<8x128xf32>,
    %c0_i32 = arith.constant 0 : i32
    %14 = arith.index_cast %c0_i32 : i32 to index
    %c0_17 = arith.constant 0 : index
    %c0_18 = arith.constant 0 : index
    %15 = vector.load %arg10[%14, %c0_17, %c0_18] : memref<8x8x512xf32, #tpu.memory_space<vmem>>, vector<1x8x512xf32>
    %16 = vector.shape_cast %15 : vector<1x8x512xf32> to vector<8x512xf32>
    %c0_19 = arith.constant 0 : index
    %c0_20 = arith.constant 0 : index
    %17 = vector.load %arg8[%c0_19, %c0_20] : memref<8x128xf32, #tpu.memory_space<vmem>>, vector<8x128xf32>
    %18 = arith.truncf %17 : vector<8x128xf32> to vector<8x128xbf16>
    %cst_21 = arith.constant dense<0.000000e+00> : vector<8x512xf32>
    %19 = tpu.matmul %18, %9, %cst_21 {dimension_numbers = #tpu.dot_dimension_numbers<[1], [0], [0], [1], [0, 0, 1, 1], [], []>} : vector<8x128xbf16>, vector<128x512xbf16>, vector<8x512xf32> -> vector<8x512xf32>
    %20 = arith.addf %16, %19 : vector<8x512xf32>
    %21 = vector.extract_strided_slice %20 {offsets = [0, 0], sizes = [8, 128], strides = [1, 1]} : vector<8x512xf32> to vector<8x128xf32>
    %22 = arith.negf %21 : vector<8x128xf32>
    %23 = math.exp %22 : vector<8x128xf32>
    %cst_22 = arith.constant 1.000000e+00 : f32
    %24 = vector.broadcast %cst_22 : f32 to vector<8x128xf32>
    %25 = arith.addf %24, %23 : vector<8x128xf32>
    %26 = arith.divf %24, %25 : vector<8x128xf32>
    %27 = vector.extract_strided_slice %20 {offsets = [0, 128], sizes = [8, 128], strides = [1, 1]} : vector<8x512xf32> to vector<8x128xf32>
    %28 = arith.negf %27 : vector<8x128xf32>
    %29 = math.exp %28 : vector<8x128xf32>
    %cst_23 = arith.constant 1.000000e+00 : f32
    %30 = vector.broadcast %cst_23 : f32 to vector<8x128xf32>
    %31 = arith.addf %30, %29 : vector<8x128xf32>
    %32 = arith.divf %30, %31 : vector<8x128xf32>
    %33 = vector.extract_strided_slice %20 {offsets = [0, 256], sizes = [8, 128], strides = [1, 1]} : vector<8x512xf32> to vector<8x128xf32>
    %34 = math.tanh %33 : vector<8x128xf32>
    %35 = vector.extract_strided_slice %20 {offsets = [0, 384], sizes = [8, 128], strides = [1, 1]} : vector<8x512xf32> to vector<8x128xf32>
    %36 = arith.negf %35 : vector<8x128xf32>
    %37 = math.exp %36 : vector<8x128xf32>
    %cst_24 = arith.constant 1.000000e+00 : f32
    %38 = vector.broadcast %cst_24 : f32 to vector<8x128xf32>
    %39 = arith.addf %38, %37 : vector<8x128xf32>
    %40 = arith.divf %38, %39 : vector<8x128xf32>
    %c0_25 = arith.constant 0 : index
    %c0_26 = arith.constant 0 : index
    %41 = vector.load %arg9[%c0_25, %c0_26] : memref<8x128xf32, #tpu.memory_space<vmem>>, vector<8x128xf32>
    %42 = arith.mulf %32, %41 : vector<8x128xf32>
    %43 = arith.mulf %26, %34 : vector<8x128xf32>
    %44 = arith.addf %42, %43 : vector<8x128xf32>
    %45 = math.tanh %44 : vector<8x128xf32>
    %46 = arith.mulf %40, %45 : vector<8x128xf32>
    %c0_27 = arith.constant 0 : index
    %c0_28 = arith.constant 0 : index
    %47 = vector.load %arg8[%c0_27, %c0_28] : memref<8x128xf32, #tpu.memory_space<vmem>>, vector<8x128xf32>
    tpu.vector_store %arg8[%c0_27, %c0_28], %46 {strides = array<i32>} : memref<8x128xf32, #tpu.memory_space<vmem>>, vector<8x128xf32>,
    %c0_29 = arith.constant 0 : index
    %c0_30 = arith.constant 0 : index
    %48 = vector.load %arg9[%c0_29, %c0_30] : memref<8x128xf32, #tpu.memory_space<vmem>>, vector<8x128xf32>
    tpu.vector_store %arg9[%c0_29, %c0_30], %44 {strides = array<i32>} : memref<8x128xf32, #tpu.memory_space<vmem>>, vector<8x128xf32>,
    %c1_i32 = arith.constant 1 : i32
    %49 = arith.index_cast %c1_i32 : i32 to index
    %c0_31 = arith.constant 0 : index
    %c0_32 = arith.constant 0 : index
    %50 = vector.load %arg10[%49, %c0_31, %c0_32] : memref<8x8x512xf32, #tpu.memory_space<vmem>>, vector<1x8x512xf32>
    %51 = vector.shape_cast %50 : vector<1x8x512xf32> to vector<8x512xf32>
    %c0_33 = arith.constant 0 : index
    %c0_34 = arith.constant 0 : index
    %52 = vector.load %arg8[%c0_33, %c0_34] : memref<8x128xf32, #tpu.memory_space<vmem>>, vector<8x128xf32>
    %53 = arith.truncf %52 : vector<8x128xf32> to vector<8x128xbf16>
    %cst_35 = arith.constant dense<0.000000e+00> : vector<8x512xf32>
    %54 = tpu.matmul %53, %9, %cst_35 {dimension_numbers = #tpu.dot_dimension_numbers<[1], [0], [0], [1], [0, 0, 1, 1], [], []>} : vector<8x128xbf16>, vector<128x512xbf16>, vector<8x512xf32> -> vector<8x512xf32>
    %55 = arith.addf %51, %54 : vector<8x512xf32>
    %56 = vector.extract_strided_slice %55 {offsets = [0, 0], sizes = [8, 128], strides = [1, 1]} : vector<8x512xf32> to vector<8x128xf32>
    %57 = arith.negf %56 : vector<8x128xf32>
    %58 = math.exp %57 : vector<8x128xf32>
    %cst_36 = arith.constant 1.000000e+00 : f32
    %59 = vector.broadcast %cst_36 : f32 to vector<8x128xf32>
    %60 = arith.addf %59, %58 : vector<8x128xf32>
    %61 = arith.divf %59, %60 : vector<8x128xf32>
    %62 = vector.extract_strided_slice %55 {offsets = [0, 128], sizes = [8, 128], strides = [1, 1]} : vector<8x512xf32> to vector<8x128xf32>
    %63 = arith.negf %62 : vector<8x128xf32>
    %64 = math.exp %63 : vector<8x128xf32>
    %cst_37 = arith.constant 1.000000e+00 : f32
    %65 = vector.broadcast %cst_37 : f32 to vector<8x128xf32>
    %66 = arith.addf %65, %64 : vector<8x128xf32>
    %67 = arith.divf %65, %66 : vector<8x128xf32>
    %68 = vector.extract_strided_slice %55 {offsets = [0, 256], sizes = [8, 128], strides = [1, 1]} : vector<8x512xf32> to vector<8x128xf32>
    %69 = math.tanh %68 : vector<8x128xf32>
    %70 = vector.extract_strided_slice %55 {offsets = [0, 384], sizes = [8, 128], strides = [1, 1]} : vector<8x512xf32> to vector<8x128xf32>
    %71 = arith.negf %70 : vector<8x128xf32>
    %72 = math.exp %71 : vector<8x128xf32>
    %cst_38 = arith.constant 1.000000e+00 : f32
    %73 = vector.broadcast %cst_38 : f32 to vector<8x128xf32>
    %74 = arith.addf %73, %72 : vector<8x128xf32>
    %75 = arith.divf %73, %74 : vector<8x128xf32>
    %c0_39 = arith.constant 0 : index
    %c0_40 = arith.constant 0 : index
    %76 = vector.load %arg9[%c0_39, %c0_40] : memref<8x128xf32, #tpu.memory_space<vmem>>, vector<8x128xf32>
    %77 = arith.mulf %67, %76 : vector<8x128xf32>
    %78 = arith.mulf %61, %69 : vector<8x128xf32>
    %79 = arith.addf %77, %78 : vector<8x128xf32>
    %80 = math.tanh %79 : vector<8x128xf32>
    %81 = arith.mulf %75, %80 : vector<8x128xf32>
    %c0_41 = arith.constant 0 : index
    %c0_42 = arith.constant 0 : index
    %82 = vector.load %arg8[%c0_41, %c0_42] : memref<8x128xf32, #tpu.memory_space<vmem>>, vector<8x128xf32>
    tpu.vector_store %arg8[%c0_41, %c0_42], %81 {strides = array<i32>} : memref<8x128xf32, #tpu.memory_space<vmem>>, vector<8x128xf32>,
    %c0_43 = arith.constant 0 : index
    %c0_44 = arith.constant 0 : index
    %83 = vector.load %arg9[%c0_43, %c0_44] : memref<8x128xf32, #tpu.memory_space<vmem>>, vector<8x128xf32>
    tpu.vector_store %arg9[%c0_43, %c0_44], %79 {strides = array<i32>} : memref<8x128xf32, #tpu.memory_space<vmem>>, vector<8x128xf32>,
    %c2_i32 = arith.constant 2 : i32
    %84 = arith.index_cast %c2_i32 : i32 to index
    %c0_45 = arith.constant 0 : index
    %c0_46 = arith.constant 0 : index
    %85 = vector.load %arg10[%84, %c0_45, %c0_46] : memref<8x8x512xf32, #tpu.memory_space<vmem>>, vector<1x8x512xf32>
    %86 = vector.shape_cast %85 : vector<1x8x512xf32> to vector<8x512xf32>
    %c0_47 = arith.constant 0 : index
    %c0_48 = arith.constant 0 : index
    %87 = vector.load %arg8[%c0_47, %c0_48] : memref<8x128xf32, #tpu.memory_space<vmem>>, vector<8x128xf32>
    %88 = arith.truncf %87 : vector<8x128xf32> to vector<8x128xbf16>
    %cst_49 = arith.constant dense<0.000000e+00> : vector<8x512xf32>
    %89 = tpu.matmul %88, %9, %cst_49 {dimension_numbers = #tpu.dot_dimension_numbers<[1], [0], [0], [1], [0, 0, 1, 1], [], []>} : vector<8x128xbf16>, vector<128x512xbf16>, vector<8x512xf32> -> vector<8x512xf32>
    %90 = arith.addf %86, %89 : vector<8x512xf32>
    %91 = vector.extract_strided_slice %90 {offsets = [0, 0], sizes = [8, 128], strides = [1, 1]} : vector<8x512xf32> to vector<8x128xf32>
    %92 = arith.negf %91 : vector<8x128xf32>
    %93 = math.exp %92 : vector<8x128xf32>
    %cst_50 = arith.constant 1.000000e+00 : f32
    %94 = vector.broadcast %cst_50 : f32 to vector<8x128xf32>
    %95 = arith.addf %94, %93 : vector<8x128xf32>
    %96 = arith.divf %94, %95 : vector<8x128xf32>
    %97 = vector.extract_strided_slice %90 {offsets = [0, 128], sizes = [8, 128], strides = [1, 1]} : vector<8x512xf32> to vector<8x128xf32>
    %98 = arith.negf %97 : vector<8x128xf32>
    %99 = math.exp %98 : vector<8x128xf32>
    %cst_51 = arith.constant 1.000000e+00 : f32
    %100 = vector.broadcast %cst_51 : f32 to vector<8x128xf32>
    %101 = arith.addf %100, %99 : vector<8x128xf32>
    %102 = arith.divf %100, %101 : vector<8x128xf32>
    %103 = vector.extract_strided_slice %90 {offsets = [0, 256], sizes = [8, 128], strides = [1, 1]} : vector<8x512xf32> to vector<8x128xf32>
    %104 = math.tanh %103 : vector<8x128xf32>
    %105 = vector.extract_strided_slice %90 {offsets = [0, 384], sizes = [8, 128], strides = [1, 1]} : vector<8x512xf32> to vector<8x128xf32>
    %106 = arith.negf %105 : vector<8x128xf32>
    %107 = math.exp %106 : vector<8x128xf32>
    %cst_52 = arith.constant 1.000000e+00 : f32
    %108 = vector.broadcast %cst_52 : f32 to vector<8x128xf32>
    %109 = arith.addf %108, %107 : vector<8x128xf32>
    %110 = arith.divf %108, %109 : vector<8x128xf32>
    %c0_53 = arith.constant 0 : index
    %c0_54 = arith.constant 0 : index
    %111 = vector.load %arg9[%c0_53, %c0_54] : memref<8x128xf32, #tpu.memory_space<vmem>>, vector<8x128xf32>
    %112 = arith.mulf %102, %111 : vector<8x128xf32>
    %113 = arith.mulf %96, %104 : vector<8x128xf32>
    %114 = arith.addf %112, %113 : vector<8x128xf32>
    %115 = math.tanh %114 : vector<8x128xf32>
    %116 = arith.mulf %110, %115 : vector<8x128xf32>
    %c0_55 = arith.constant 0 : index
    %c0_56 = arith.constant 0 : index
    %117 = vector.load %arg8[%c0_55, %c0_56] : memref<8x128xf32, #tpu.memory_space<vmem>>, vector<8x128xf32>
    tpu.vector_store %arg8[%c0_55, %c0_56], %116 {strides = array<i32>} : memref<8x128xf32, #tpu.memory_space<vmem>>, vector<8x128xf32>,
    %c0_57 = arith.constant 0 : index
    %c0_58 = arith.constant 0 : index
    %118 = vector.load %arg9[%c0_57, %c0_58] : memref<8x128xf32, #tpu.memory_space<vmem>>, vector<8x128xf32>
    tpu.vector_store %arg9[%c0_57, %c0_58], %114 {strides = array<i32>} : memref<8x128xf32, #tpu.memory_space<vmem>>, vector<8x128xf32>,
    %c3_i32 = arith.constant 3 : i32
    %119 = arith.index_cast %c3_i32 : i32 to index
    %c0_59 = arith.constant 0 : index
    %c0_60 = arith.constant 0 : index
    %120 = vector.load %arg10[%119, %c0_59, %c0_60] : memref<8x8x512xf32, #tpu.memory_space<vmem>>, vector<1x8x512xf32>
    %121 = vector.shape_cast %120 : vector<1x8x512xf32> to vector<8x512xf32>
    %c0_61 = arith.constant 0 : index
    %c0_62 = arith.constant 0 : index
    %122 = vector.load %arg8[%c0_61, %c0_62] : memref<8x128xf32, #tpu.memory_space<vmem>>, vector<8x128xf32>
    %123 = arith.truncf %122 : vector<8x128xf32> to vector<8x128xbf16>
    %cst_63 = arith.constant dense<0.000000e+00> : vector<8x512xf32>
    %124 = tpu.matmul %123, %9, %cst_63 {dimension_numbers = #tpu.dot_dimension_numbers<[1], [0], [0], [1], [0, 0, 1, 1], [], []>} : vector<8x128xbf16>, vector<128x512xbf16>, vector<8x512xf32> -> vector<8x512xf32>
    %125 = arith.addf %121, %124 : vector<8x512xf32>
    %126 = vector.extract_strided_slice %125 {offsets = [0, 0], sizes = [8, 128], strides = [1, 1]} : vector<8x512xf32> to vector<8x128xf32>
    %127 = arith.negf %126 : vector<8x128xf32>
    %128 = math.exp %127 : vector<8x128xf32>
    %cst_64 = arith.constant 1.000000e+00 : f32
    %129 = vector.broadcast %cst_64 : f32 to vector<8x128xf32>
    %130 = arith.addf %129, %128 : vector<8x128xf32>
    %131 = arith.divf %129, %130 : vector<8x128xf32>
    %132 = vector.extract_strided_slice %125 {offsets = [0, 128], sizes = [8, 128], strides = [1, 1]} : vector<8x512xf32> to vector<8x128xf32>
    %133 = arith.negf %132 : vector<8x128xf32>
    %134 = math.exp %133 : vector<8x128xf32>
    %cst_65 = arith.constant 1.000000e+00 : f32
    %135 = vector.broadcast %cst_65 : f32 to vector<8x128xf32>
    %136 = arith.addf %135, %134 : vector<8x128xf32>
    %137 = arith.divf %135, %136 : vector<8x128xf32>
    %138 = vector.extract_strided_slice %125 {offsets = [0, 256], sizes = [8, 128], strides = [1, 1]} : vector<8x512xf32> to vector<8x128xf32>
    %139 = math.tanh %138 : vector<8x128xf32>
    %140 = vector.extract_strided_slice %125 {offsets = [0, 384], sizes = [8, 128], strides = [1, 1]} : vector<8x512xf32> to vector<8x128xf32>
    %141 = arith.negf %140 : vector<8x128xf32>
    %142 = math.exp %141 : vector<8x128xf32>
    %cst_66 = arith.constant 1.000000e+00 : f32
    %143 = vector.broadcast %cst_66 : f32 to vector<8x128xf32>
    %144 = arith.addf %143, %142 : vector<8x128xf32>
    %145 = arith.divf %143, %144 : vector<8x128xf32>
    %c0_67 = arith.constant 0 : index
    %c0_68 = arith.constant 0 : index
    %146 = vector.load %arg9[%c0_67, %c0_68] : memref<8x128xf32, #tpu.memory_space<vmem>>, vector<8x128xf32>
    %147 = arith.mulf %137, %146 : vector<8x128xf32>
    %148 = arith.mulf %131, %139 : vector<8x128xf32>
    %149 = arith.addf %147, %148 : vector<8x128xf32>
    %150 = math.tanh %149 : vector<8x128xf32>
    %151 = arith.mulf %145, %150 : vector<8x128xf32>
    %c0_69 = arith.constant 0 : index
    %c0_70 = arith.constant 0 : index
    %152 = vector.load %arg8[%c0_69, %c0_70] : memref<8x128xf32, #tpu.memory_space<vmem>>, vector<8x128xf32>
    tpu.vector_store %arg8[%c0_69, %c0_70], %151 {strides = array<i32>} : memref<8x128xf32, #tpu.memory_space<vmem>>, vector<8x128xf32>,
    %c0_71 = arith.constant 0 : index
    %c0_72 = arith.constant 0 : index
    %153 = vector.load %arg9[%c0_71, %c0_72] : memref<8x128xf32, #tpu.memory_space<vmem>>, vector<8x128xf32>
    tpu.vector_store %arg9[%c0_71, %c0_72], %149 {strides = array<i32>} : memref<8x128xf32, #tpu.memory_space<vmem>>, vector<8x128xf32>,
    %c4_i32 = arith.constant 4 : i32
    %154 = arith.index_cast %c4_i32 : i32 to index
    %c0_73 = arith.constant 0 : index
    %c0_74 = arith.constant 0 : index
    %155 = vector.load %arg10[%154, %c0_73, %c0_74] : memref<8x8x512xf32, #tpu.memory_space<vmem>>, vector<1x8x512xf32>
    %156 = vector.shape_cast %155 : vector<1x8x512xf32> to vector<8x512xf32>
    %c0_75 = arith.constant 0 : index
    %c0_76 = arith.constant 0 : index
    %157 = vector.load %arg8[%c0_75, %c0_76] : memref<8x128xf32, #tpu.memory_space<vmem>>, vector<8x128xf32>
    %158 = arith.truncf %157 : vector<8x128xf32> to vector<8x128xbf16>
    %cst_77 = arith.constant dense<0.000000e+00> : vector<8x512xf32>
    %159 = tpu.matmul %158, %9, %cst_77 {dimension_numbers = #tpu.dot_dimension_numbers<[1], [0], [0], [1], [0, 0, 1, 1], [], []>} : vector<8x128xbf16>, vector<128x512xbf16>, vector<8x512xf32> -> vector<8x512xf32>
    %160 = arith.addf %156, %159 : vector<8x512xf32>
    %161 = vector.extract_strided_slice %160 {offsets = [0, 0], sizes = [8, 128], strides = [1, 1]} : vector<8x512xf32> to vector<8x128xf32>
    %162 = arith.negf %161 : vector<8x128xf32>
    %163 = math.exp %162 : vector<8x128xf32>
    %cst_78 = arith.constant 1.000000e+00 : f32
    %164 = vector.broadcast %cst_78 : f32 to vector<8x128xf32>
    %165 = arith.addf %164, %163 : vector<8x128xf32>
    %166 = arith.divf %164, %165 : vector<8x128xf32>
    %167 = vector.extract_strided_slice %160 {offsets = [0, 128], sizes = [8, 128], strides = [1, 1]} : vector<8x512xf32> to vector<8x128xf32>
    %168 = arith.negf %167 : vector<8x128xf32>
    %169 = math.exp %168 : vector<8x128xf32>
    %cst_79 = arith.constant 1.000000e+00 : f32
    %170 = vector.broadcast %cst_79 : f32 to vector<8x128xf32>
    %171 = arith.addf %170, %169 : vector<8x128xf32>
    %172 = arith.divf %170, %171 : vector<8x128xf32>
    %173 = vector.extract_strided_slice %160 {offsets = [0, 256], sizes = [8, 128], strides = [1, 1]} : vector<8x512xf32> to vector<8x128xf32>
    %174 = math.tanh %173 : vector<8x128xf32>
    %175 = vector.extract_strided_slice %160 {offsets = [0, 384], sizes = [8, 128], strides = [1, 1]} : vector<8x512xf32> to vector<8x128xf32>
    %176 = arith.negf %175 : vector<8x128xf32>
    %177 = math.exp %176 : vector<8x128xf32>
    %cst_80 = arith.constant 1.000000e+00 : f32
    %178 = vector.broadcast %cst_80 : f32 to vector<8x128xf32>
    %179 = arith.addf %178, %177 : vector<8x128xf32>
    %180 = arith.divf %178, %179 : vector<8x128xf32>
    %c0_81 = arith.constant 0 : index
    %c0_82 = arith.constant 0 : index
    %181 = vector.load %arg9[%c0_81, %c0_82] : memref<8x128xf32, #tpu.memory_space<vmem>>, vector<8x128xf32>
    %182 = arith.mulf %172, %181 : vector<8x128xf32>
    %183 = arith.mulf %166, %174 : vector<8x128xf32>
    %184 = arith.addf %182, %183 : vector<8x128xf32>
    %185 = math.tanh %184 : vector<8x128xf32>
    %186 = arith.mulf %180, %185 : vector<8x128xf32>
    %c0_83 = arith.constant 0 : index
    %c0_84 = arith.constant 0 : index
    %187 = vector.load %arg8[%c0_83, %c0_84] : memref<8x128xf32, #tpu.memory_space<vmem>>, vector<8x128xf32>
    tpu.vector_store %arg8[%c0_83, %c0_84], %186 {strides = array<i32>} : memref<8x128xf32, #tpu.memory_space<vmem>>, vector<8x128xf32>,
    %c0_85 = arith.constant 0 : index
    %c0_86 = arith.constant 0 : index
    %188 = vector.load %arg9[%c0_85, %c0_86] : memref<8x128xf32, #tpu.memory_space<vmem>>, vector<8x128xf32>
    tpu.vector_store %arg9[%c0_85, %c0_86], %184 {strides = array<i32>} : memref<8x128xf32, #tpu.memory_space<vmem>>, vector<8x128xf32>,
    %c5_i32 = arith.constant 5 : i32
    %189 = arith.index_cast %c5_i32 : i32 to index
    %c0_87 = arith.constant 0 : index
    %c0_88 = arith.constant 0 : index
    %190 = vector.load %arg10[%189, %c0_87, %c0_88] : memref<8x8x512xf32, #tpu.memory_space<vmem>>, vector<1x8x512xf32>
    %191 = vector.shape_cast %190 : vector<1x8x512xf32> to vector<8x512xf32>
    %c0_89 = arith.constant 0 : index
    %c0_90 = arith.constant 0 : index
    %192 = vector.load %arg8[%c0_89, %c0_90] : memref<8x128xf32, #tpu.memory_space<vmem>>, vector<8x128xf32>
    %193 = arith.truncf %192 : vector<8x128xf32> to vector<8x128xbf16>
    %cst_91 = arith.constant dense<0.000000e+00> : vector<8x512xf32>
    %194 = tpu.matmul %193, %9, %cst_91 {dimension_numbers = #tpu.dot_dimension_numbers<[1], [0], [0], [1], [0, 0, 1, 1], [], []>} : vector<8x128xbf16>, vector<128x512xbf16>, vector<8x512xf32> -> vector<8x512xf32>
    %195 = arith.addf %191, %194 : vector<8x512xf32>
    %196 = vector.extract_strided_slice %195 {offsets = [0, 0], sizes = [8, 128], strides = [1, 1]} : vector<8x512xf32> to vector<8x128xf32>
    %197 = arith.negf %196 : vector<8x128xf32>
    %198 = math.exp %197 : vector<8x128xf32>
    %cst_92 = arith.constant 1.000000e+00 : f32
    %199 = vector.broadcast %cst_92 : f32 to vector<8x128xf32>
    %200 = arith.addf %199, %198 : vector<8x128xf32>
    %201 = arith.divf %199, %200 : vector<8x128xf32>
    %202 = vector.extract_strided_slice %195 {offsets = [0, 128], sizes = [8, 128], strides = [1, 1]} : vector<8x512xf32> to vector<8x128xf32>
    %203 = arith.negf %202 : vector<8x128xf32>
    %204 = math.exp %203 : vector<8x128xf32>
    %cst_93 = arith.constant 1.000000e+00 : f32
    %205 = vector.broadcast %cst_93 : f32 to vector<8x128xf32>
    %206 = arith.addf %205, %204 : vector<8x128xf32>
    %207 = arith.divf %205, %206 : vector<8x128xf32>
    %208 = vector.extract_strided_slice %195 {offsets = [0, 256], sizes = [8, 128], strides = [1, 1]} : vector<8x512xf32> to vector<8x128xf32>
    %209 = math.tanh %208 : vector<8x128xf32>
    %210 = vector.extract_strided_slice %195 {offsets = [0, 384], sizes = [8, 128], strides = [1, 1]} : vector<8x512xf32> to vector<8x128xf32>
    %211 = arith.negf %210 : vector<8x128xf32>
    %212 = math.exp %211 : vector<8x128xf32>
    %cst_94 = arith.constant 1.000000e+00 : f32
    %213 = vector.broadcast %cst_94 : f32 to vector<8x128xf32>
    %214 = arith.addf %213, %212 : vector<8x128xf32>
    %215 = arith.divf %213, %214 : vector<8x128xf32>
    %c0_95 = arith.constant 0 : index
    %c0_96 = arith.constant 0 : index
    %216 = vector.load %arg9[%c0_95, %c0_96] : memref<8x128xf32, #tpu.memory_space<vmem>>, vector<8x128xf32>
    %217 = arith.mulf %207, %216 : vector<8x128xf32>
    %218 = arith.mulf %201, %209 : vector<8x128xf32>
    %219 = arith.addf %217, %218 : vector<8x128xf32>
    %220 = math.tanh %219 : vector<8x128xf32>
    %221 = arith.mulf %215, %220 : vector<8x128xf32>
    %c0_97 = arith.constant 0 : index
    %c0_98 = arith.constant 0 : index
    %222 = vector.load %arg8[%c0_97, %c0_98] : memref<8x128xf32, #tpu.memory_space<vmem>>, vector<8x128xf32>
    tpu.vector_store %arg8[%c0_97, %c0_98], %221 {strides = array<i32>} : memref<8x128xf32, #tpu.memory_space<vmem>>, vector<8x128xf32>,
    %c0_99 = arith.constant 0 : index
    %c0_100 = arith.constant 0 : index
    %223 = vector.load %arg9[%c0_99, %c0_100] : memref<8x128xf32, #tpu.memory_space<vmem>>, vector<8x128xf32>
    tpu.vector_store %arg9[%c0_99, %c0_100], %219 {strides = array<i32>} : memref<8x128xf32, #tpu.memory_space<vmem>>, vector<8x128xf32>,
    %c6_i32 = arith.constant 6 : i32
    %224 = arith.index_cast %c6_i32 : i32 to index
    %c0_101 = arith.constant 0 : index
    %c0_102 = arith.constant 0 : index
    %225 = vector.load %arg10[%224, %c0_101, %c0_102] : memref<8x8x512xf32, #tpu.memory_space<vmem>>, vector<1x8x512xf32>
    %226 = vector.shape_cast %225 : vector<1x8x512xf32> to vector<8x512xf32>
    %c0_103 = arith.constant 0 : index
    %c0_104 = arith.constant 0 : index
    %227 = vector.load %arg8[%c0_103, %c0_104] : memref<8x128xf32, #tpu.memory_space<vmem>>, vector<8x128xf32>
    %228 = arith.truncf %227 : vector<8x128xf32> to vector<8x128xbf16>
    %cst_105 = arith.constant dense<0.000000e+00> : vector<8x512xf32>
    %229 = tpu.matmul %228, %9, %cst_105 {dimension_numbers = #tpu.dot_dimension_numbers<[1], [0], [0], [1], [0, 0, 1, 1], [], []>} : vector<8x128xbf16>, vector<128x512xbf16>, vector<8x512xf32> -> vector<8x512xf32>
    %230 = arith.addf %226, %229 : vector<8x512xf32>
    %231 = vector.extract_strided_slice %230 {offsets = [0, 0], sizes = [8, 128], strides = [1, 1]} : vector<8x512xf32> to vector<8x128xf32>
    %232 = arith.negf %231 : vector<8x128xf32>
    %233 = math.exp %232 : vector<8x128xf32>
    %cst_106 = arith.constant 1.000000e+00 : f32
    %234 = vector.broadcast %cst_106 : f32 to vector<8x128xf32>
    %235 = arith.addf %234, %233 : vector<8x128xf32>
    %236 = arith.divf %234, %235 : vector<8x128xf32>
    %237 = vector.extract_strided_slice %230 {offsets = [0, 128], sizes = [8, 128], strides = [1, 1]} : vector<8x512xf32> to vector<8x128xf32>
    %238 = arith.negf %237 : vector<8x128xf32>
    %239 = math.exp %238 : vector<8x128xf32>
    %cst_107 = arith.constant 1.000000e+00 : f32
    %240 = vector.broadcast %cst_107 : f32 to vector<8x128xf32>
    %241 = arith.addf %240, %239 : vector<8x128xf32>
    %242 = arith.divf %240, %241 : vector<8x128xf32>
    %243 = vector.extract_strided_slice %230 {offsets = [0, 256], sizes = [8, 128], strides = [1, 1]} : vector<8x512xf32> to vector<8x128xf32>
    %244 = math.tanh %243 : vector<8x128xf32>
    %245 = vector.extract_strided_slice %230 {offsets = [0, 384], sizes = [8, 128], strides = [1, 1]} : vector<8x512xf32> to vector<8x128xf32>
    %246 = arith.negf %245 : vector<8x128xf32>
    %247 = math.exp %246 : vector<8x128xf32>
    %cst_108 = arith.constant 1.000000e+00 : f32
    %248 = vector.broadcast %cst_108 : f32 to vector<8x128xf32>
    %249 = arith.addf %248, %247 : vector<8x128xf32>
    %250 = arith.divf %248, %249 : vector<8x128xf32>
    %c0_109 = arith.constant 0 : index
    %c0_110 = arith.constant 0 : index
    %251 = vector.load %arg9[%c0_109, %c0_110] : memref<8x128xf32, #tpu.memory_space<vmem>>, vector<8x128xf32>
    %252 = arith.mulf %242, %251 : vector<8x128xf32>
    %253 = arith.mulf %236, %244 : vector<8x128xf32>
    %254 = arith.addf %252, %253 : vector<8x128xf32>
    %255 = math.tanh %254 : vector<8x128xf32>
    %256 = arith.mulf %250, %255 : vector<8x128xf32>
    %c0_111 = arith.constant 0 : index
    %c0_112 = arith.constant 0 : index
    %257 = vector.load %arg8[%c0_111, %c0_112] : memref<8x128xf32, #tpu.memory_space<vmem>>, vector<8x128xf32>
    tpu.vector_store %arg8[%c0_111, %c0_112], %256 {strides = array<i32>} : memref<8x128xf32, #tpu.memory_space<vmem>>, vector<8x128xf32>,
    %c0_113 = arith.constant 0 : index
    %c0_114 = arith.constant 0 : index
    %258 = vector.load %arg9[%c0_113, %c0_114] : memref<8x128xf32, #tpu.memory_space<vmem>>, vector<8x128xf32>
    tpu.vector_store %arg9[%c0_113, %c0_114], %254 {strides = array<i32>} : memref<8x128xf32, #tpu.memory_space<vmem>>, vector<8x128xf32>,
    %c7_i32 = arith.constant 7 : i32
    %259 = arith.index_cast %c7_i32 : i32 to index
    %c0_115 = arith.constant 0 : index
    %c0_116 = arith.constant 0 : index
    %260 = vector.load %arg10[%259, %c0_115, %c0_116] : memref<8x8x512xf32, #tpu.memory_space<vmem>>, vector<1x8x512xf32>
    %261 = vector.shape_cast %260 : vector<1x8x512xf32> to vector<8x512xf32>
    %c0_117 = arith.constant 0 : index
    %c0_118 = arith.constant 0 : index
    %262 = vector.load %arg8[%c0_117, %c0_118] : memref<8x128xf32, #tpu.memory_space<vmem>>, vector<8x128xf32>
    %263 = arith.truncf %262 : vector<8x128xf32> to vector<8x128xbf16>
    %cst_119 = arith.constant dense<0.000000e+00> : vector<8x512xf32>
    %264 = tpu.matmul %263, %9, %cst_119 {dimension_numbers = #tpu.dot_dimension_numbers<[1], [0], [0], [1], [0, 0, 1, 1], [], []>} : vector<8x128xbf16>, vector<128x512xbf16>, vector<8x512xf32> -> vector<8x512xf32>
    %265 = arith.addf %261, %264 : vector<8x512xf32>
    %266 = vector.extract_strided_slice %265 {offsets = [0, 0], sizes = [8, 128], strides = [1, 1]} : vector<8x512xf32> to vector<8x128xf32>
    %267 = arith.negf %266 : vector<8x128xf32>
    %268 = math.exp %267 : vector<8x128xf32>
    %cst_120 = arith.constant 1.000000e+00 : f32
    %269 = vector.broadcast %cst_120 : f32 to vector<8x128xf32>
    %270 = arith.addf %269, %268 : vector<8x128xf32>
    %271 = arith.divf %269, %270 : vector<8x128xf32>
    %272 = vector.extract_strided_slice %265 {offsets = [0, 128], sizes = [8, 128], strides = [1, 1]} : vector<8x512xf32> to vector<8x128xf32>
    %273 = arith.negf %272 : vector<8x128xf32>
    %274 = math.exp %273 : vector<8x128xf32>
    %cst_121 = arith.constant 1.000000e+00 : f32
    %275 = vector.broadcast %cst_121 : f32 to vector<8x128xf32>
    %276 = arith.addf %275, %274 : vector<8x128xf32>
    %277 = arith.divf %275, %276 : vector<8x128xf32>
    %278 = vector.extract_strided_slice %265 {offsets = [0, 256], sizes = [8, 128], strides = [1, 1]} : vector<8x512xf32> to vector<8x128xf32>
    %279 = math.tanh %278 : vector<8x128xf32>
    %280 = vector.extract_strided_slice %265 {offsets = [0, 384], sizes = [8, 128], strides = [1, 1]} : vector<8x512xf32> to vector<8x128xf32>
    %281 = arith.negf %280 : vector<8x128xf32>
    %282 = math.exp %281 : vector<8x128xf32>
    %cst_122 = arith.constant 1.000000e+00 : f32
    %283 = vector.broadcast %cst_122 : f32 to vector<8x128xf32>
    %284 = arith.addf %283, %282 : vector<8x128xf32>
    %285 = arith.divf %283, %284 : vector<8x128xf32>
    %c0_123 = arith.constant 0 : index
    %c0_124 = arith.constant 0 : index
    %286 = vector.load %arg9[%c0_123, %c0_124] : memref<8x128xf32, #tpu.memory_space<vmem>>, vector<8x128xf32>
    %287 = arith.mulf %277, %286 : vector<8x128xf32>
    %288 = arith.mulf %271, %279 : vector<8x128xf32>
    %289 = arith.addf %287, %288 : vector<8x128xf32>
    %290 = math.tanh %289 : vector<8x128xf32>
    %291 = arith.mulf %285, %290 : vector<8x128xf32>
    %c0_125 = arith.constant 0 : index
    %c0_126 = arith.constant 0 : index
    %292 = vector.load %arg8[%c0_125, %c0_126] : memref<8x128xf32, #tpu.memory_space<vmem>>, vector<8x128xf32>
    tpu.vector_store %arg8[%c0_125, %c0_126], %291 {strides = array<i32>} : memref<8x128xf32, #tpu.memory_space<vmem>>, vector<8x128xf32>,
    %c0_127 = arith.constant 0 : index
    %c0_128 = arith.constant 0 : index
    %293 = vector.load %arg9[%c0_127, %c0_128] : memref<8x128xf32, #tpu.memory_space<vmem>>, vector<8x128xf32>
    tpu.vector_store %arg9[%c0_127, %c0_128], %289 {strides = array<i32>} : memref<8x128xf32, #tpu.memory_space<vmem>>, vector<8x128xf32>,
    %c8_i32 = arith.constant 8 : i32
    %c0_129 = arith.constant 0 : index
    %c0_130 = arith.constant 0 : index
    %294 = vector.load %arg8[%c0_129, %c0_130] : memref<8x128xf32, #tpu.memory_space<vmem>>, vector<8x128xf32>
    %295 = arith.truncf %294 : vector<8x128xf32> to vector<8x128xbf16>
    %c0_131 = arith.constant 0 : index
    %c0_132 = arith.constant 0 : index
    %296 = vector.load %arg5[%c0_131, %c0_132] : memref<128x128xbf16, #tpu.memory_space<vmem>>, vector<128x128xbf16>
    %cst_133 = arith.constant dense<0.000000e+00> : vector<8x128xf32>
    %297 = tpu.matmul %295, %296, %cst_133 {dimension_numbers = #tpu.dot_dimension_numbers<[1], [0], [0], [1], [0, 0, 1, 1], [], []>} : vector<8x128xbf16>, vector<128x128xbf16>, vector<8x128xf32> -> vector<8x128xf32>
    %c0_134 = arith.constant 0 : index
    %c0_135 = arith.constant 0 : index
    %298 = vector.load %arg6[%c0_134, %c0_135] : memref<1x128xf32, #tpu.memory_space<vmem>>, vector<1x128xf32>
    %299 = vector.broadcast %298 : vector<1x128xf32> to vector<8x128xf32>
    %300 = arith.addf %297, %299 : vector<8x128xf32>
    %c0_136 = arith.constant 0 : index
    %c0_137 = arith.constant 0 : index
    %301 = vector.load %arg7[%c0_136, %c0_137] : memref<8x128xf32, #tpu.memory_space<vmem>>, vector<8x128xf32>
    tpu.vector_store %arg7[%c0_136, %c0_137], %300 {strides = array<i32>} : memref<8x128xf32, #tpu.memory_space<vmem>>, vector<8x128xf32>,
    return
  }
  func.func @transform_0(%arg0: i32) -> (i32, i32, i32) {
    %c0_i32 = arith.constant 0 : i32
    %c0_i32_0 = arith.constant 0 : i32
    %c0_i32_1 = arith.constant 0 : i32
    return %c0_i32, %arg0, %c0_i32_0 : i32, i32, i32
  }
  func.func @transform_1(%arg0: i32) -> (i32, i32) {
    %c0_i32 = arith.constant 0 : i32
    %c0_i32_0 = arith.constant 0 : i32
    %c0_i32_1 = arith.constant 0 : i32
    return %c0_i32, %c0_i32_0 : i32, i32
  }
  func.func @transform_2(%arg0: i32) -> (i32, i32) {
    %c0_i32 = arith.constant 0 : i32
    %c0_i32_0 = arith.constant 0 : i32
    %c0_i32_1 = arith.constant 0 : i32
    return %c0_i32, %c0_i32_0 : i32, i32
  }
  func.func @transform_3(%arg0: i32) -> (i32, i32) {
    %c0_i32 = arith.constant 0 : i32
    %c0_i32_0 = arith.constant 0 : i32
    %c0_i32_1 = arith.constant 0 : i32
    return %c0_i32, %c0_i32_0 : i32, i32
  }
  func.func @transform_4(%arg0: i32) -> (i32, i32) {
    %c0_i32 = arith.constant 0 : i32
    %c0_i32_0 = arith.constant 0 : i32
    %c0_i32_1 = arith.constant 0 : i32
    return %c0_i32, %c0_i32_0 : i32, i32
  }
  func.func @transform_5(%arg0: i32) -> (i32, i32) {
    %c0_i32 = arith.constant 0 : i32
    %c0_i32_0 = arith.constant 0 : i32
    %c0_i32_1 = arith.constant 0 : i32
    return %c0_i32, %c0_i32_0 : i32, i32
  }
  func.func @transform_6(%arg0: i32) -> (i32, i32) {
    %c0_i32 = arith.constant 0 : i32
    %c0_i32_0 = arith.constant 0 : i32
    return %arg0, %c0_i32 : i32, i32
  }
}

</mosaic_0001>

<llo_original>
// kernel: tpu_custom_call.1
$region0: #{tpu_custom_call.1}
  #allocation0 [shape = 'u32[]', space=smem, size = 0x4, offset = 0x4, fixed_abs, tag = 'smem constant byte address 0x4 - core index']
  #allocation1 [shape = 'u32[144,128]{1,0:T(1,128)}', space=vmem, size = 0x12000, scoped, tag = 'internal scratch']
  #allocation2 [shape = 'f32[8,128]{1,0:T(8,128)}', space=vmem, size = 0x1000, scoped, tag = 'scratch operand']
  #allocation3 [shape = 'f32[8,128]{1,0:T(8,128)}', space=vmem, size = 0x1000, scoped, tag = 'scratch operand']
  #allocation4 [shape = 'f32[8,8,512]{2,1,0:T(8,128)}', space=vmem, size = 0x20000, scoped, tag = 'scratch operand']
  %s0 = inlined_call_operand.hbm [shape: bf16[8,8,128], index: 0, kind: input, shape index: {}]
  %s1 = inlined_call_operand.hbm [shape: bf16[128,512], index: 1, kind: input, shape index: {}]
  %s2 = inlined_call_operand.hbm [shape: bf16[128,512], index: 2, kind: input, shape index: {}]
  %s3 = inlined_call_operand.vmem [shape: f32[1,512], index: 3, kind: input, shape index: {}]
  %s4 = inlined_call_operand.hbm [shape: bf16[128,128], index: 4, kind: input, shape index: {}]
  %s5 = inlined_call_operand.vmem [shape: f32[1,128], index: 5, kind: input, shape index: {}]
  %s6 = inlined_call_operand.hbm [shape: f32[8,128], index: 6, kind: output, shape index: {}]
  %s7 = sld [smem:[#allocation0]]
  $region50: #{tpu_custom_call.1} parent=0
    _
  %s9 = ssub.s32 1, %s7
  %s10 = scalar_select 0, %s9, %s7
  $region1: #{tpu_custom_call.1} parent=0
    #allocation5 [shape = 'u8[16384]{0}', space=vmem, size = 0x4000, scoped, tag = 'input window, operand 0, single buffered']
    #allocation6 [shape = 's32[1]{0}', space=sflag, size = 0x4, scoped, tag = 'scoped memory for tpu_custom_call.1']
    #allocation7 [shape = 's32[1]{0}', space=sflag, size = 0x4, scoped, tag = 'scoped memory for tpu_custom_call.1']
    #allocation8 [shape = 'u8[131072]{0}', space=vmem, size = 0x20000, scoped, tag = 'input window, operand 1, single buffered']
    #allocation9 [shape = 's32[1]{0}', space=sflag, size = 0x4, scoped, tag = 'scoped memory for tpu_custom_call.1']
    #allocation10 [shape = 'u8[131072]{0}', space=vmem, size = 0x20000, scoped, tag = 'input window, operand 2, single buffered']
    #allocation11 [shape = 'u8[32768]{0}', space=vmem, size = 0x8000, scoped, tag = 'input window, operand 4, single buffered']
    #allocation12 [shape = 's32[1]{0}', space=sflag, size = 0x4, scoped, tag = 'scoped memory for tpu_custom_call.1']
    #allocation13 [shape = 'u8[4096]{0}', space=vmem, size = 0x1000, scoped, tag = 'output window, operand 0, single buffered']
    %11 = vsyncpa [#allocation6], 0
    %12 = vsyncpa [#allocation9], 0
    %13 = vsyncpa [#allocation12], 0
    %14 = vsyncpa [#allocation7], 0
    // Predicated region
    $region2: #{tpu_custom_call.1} parent=1 // pred_check
      _
    $region3: #{tpu_custom_call.1} parent=1 // pred_check_branch
      %16 = sbr.rel (0) target = $region5
    $region4: #{tpu_custom_call.1} parent=1 // pred_region
      %s18 = ssub.s32 512, 512
      %19 = vsyncadd [#allocation6], %s18
      %s20 = sshll.u32 [#allocation5], 4
      %s21 = int_to_ptr.vmem [resolvable:$true] %s20
      %26 = dma.hbm_to_vmem [thread:$0]  %s0, 512, %s21, [#allocation6], 64, 64, 4
    $region5: #{tpu_custom_call.1} parent=1 // pred_fallthru
      _
    // Predicated region
    $region6: #{tpu_custom_call.1} parent=1 // pred_check
      _
    $region7: #{tpu_custom_call.1} parent=1 // pred_check_branch
      %28 = sbr.rel (0) target = $region9
    $region8: #{tpu_custom_call.1} parent=1 // pred_region
      %s30 = ssub.s32 4096, 4096
      %31 = vsyncadd [#allocation9], %s30
      %s32 = sshll.u32 [#allocation8], 4
      %s33 = int_to_ptr.vmem [resolvable:$true] %s32
      %38 = dma.hbm_to_vmem [thread:$0]  %s1, 4096, %s33, [#allocation9], 256, 256, 16
    $region9: #{tpu_custom_call.1} parent=1 // pred_fallthru
      _
    // Predicated region
    $region10: #{tpu_custom_call.1} parent=1 // pred_check
      _
    $region11: #{tpu_custom_call.1} parent=1 // pred_check_branch
      %40 = sbr.rel (0) target = $region13
    $region12: #{tpu_custom_call.1} parent=1 // pred_region
      %s42 = ssub.s32 4096, 4096
      %43 = vsyncadd [#allocation9], %s42
      %s44 = sshll.u32 [#allocation10], 4
      %s45 = int_to_ptr.vmem [resolvable:$true] %s44
      %50 = dma.hbm_to_vmem [thread:$0]  %s2, 4096, %s45, [#allocation9], 256, 256, 16
    $region13: #{tpu_custom_call.1} parent=1 // pred_fallthru
      _
    // Predicated region
    $region14: #{tpu_custom_call.1} parent=1 // pred_check
      _
    $region15: #{tpu_custom_call.1} parent=1 // pred_check_branch
      %52 = sbr.rel (0) target = $region17
    $region16: #{tpu_custom_call.1} parent=1 // pred_region
      _
    $region17: #{tpu_custom_call.1} parent=1 // pred_fallthru
      _
    // Predicated region
    $region18: #{tpu_custom_call.1} parent=1 // pred_check
      _
    $region19: #{tpu_custom_call.1} parent=1 // pred_check_branch
      %54 = sbr.rel (0) target = $region21
    $region20: #{tpu_custom_call.1} parent=1 // pred_region
      %s56 = ssub.s32 1024, 1024
      %57 = vsyncadd [#allocation12], %s56
      %s58 = sshll.u32 [#allocation11], 4
      %s59 = int_to_ptr.vmem [resolvable:$true] %s58
      %64 = dma.hbm_to_vmem [thread:$0]  %s4, 1024, %s59, [#allocation12], 64, 64, 4
    $region21: #{tpu_custom_call.1} parent=1 // pred_fallthru
      _
    // Predicated region
    $region22: #{tpu_custom_call.1} parent=1 // pred_check
      _
    $region23: #{tpu_custom_call.1} parent=1 // pred_check_branch
      %66 = sbr.rel (0) target = $region25
    $region24: #{tpu_custom_call.1} parent=1 // pred_region
      _
    $region25: #{tpu_custom_call.1} parent=1 // pred_fallthru
      _
    // Predicated region
    $region26: #{tpu_custom_call.1} parent=1 // pred_check
      _
    $region27: #{tpu_custom_call.1} parent=1 // pred_check_branch
      %68 = sbr.rel (0) target = $region29
    $region28: #{tpu_custom_call.1} parent=1 // pred_region
      %69 = dma.done [#allocation6], 512
    $region29: #{tpu_custom_call.1} parent=1 // pred_fallthru
      _
    // Predicated region
    $region30: #{tpu_custom_call.1} parent=1 // pred_check
      _
    $region31: #{tpu_custom_call.1} parent=1 // pred_check_branch
      %71 = sbr.rel (0) target = $region33
    $region32: #{tpu_custom_call.1} parent=1 // pred_region
      %72 = dma.done [#allocation9], 4096
    $region33: #{tpu_custom_call.1} parent=1 // pred_fallthru
      _
    // Predicated region
    $region34: #{tpu_custom_call.1} parent=1 // pred_check
      _
    $region35: #{tpu_custom_call.1} parent=1 // pred_check_branch
      %74 = sbr.rel (0) target = $region37
    $region36: #{tpu_custom_call.1} parent=1 // pred_region
      %75 = dma.done [#allocation9], 4096
    $region37: #{tpu_custom_call.1} parent=1 // pred_fallthru
      _
    // Predicated region
    $region38: #{tpu_custom_call.1} parent=1 // pred_check
      _
    $region39: #{tpu_custom_call.1} parent=1 // pred_check_branch
      %77 = sbr.rel (0) target = $region41
    $region40: #{tpu_custom_call.1} parent=1 // pred_region
      %78 = dma.done [#allocation12], 1024
    $region41: #{tpu_custom_call.1} parent=1 // pred_fallthru
      _
    %v80 = vld [vmem:[#allocation5] sm:$0xf]
    %v81 = vld [vmem:[#allocation5 + $0x4] sm:$0xf]
    %v82 = vld [vmem:[#allocation5 + $0x8] sm:$0xf]
    %v83 = vld [vmem:[#allocation5 + $0xc] sm:$0xf]
    %v84 = vld [vmem:[#allocation5 + $0x10] sm:$0xf]
    %v85 = vld [vmem:[#allocation5 + $0x14] sm:$0xf]
    %v86 = vld [vmem:[#allocation5 + $0x18] sm:$0xf]
    %v87 = vld [vmem:[#allocation5 + $0x1c] sm:$0xf]
    %v88 = vld [vmem:[#allocation8] sm:$0xff]
    %v89 = vld [vmem:[#allocation8 + $0x8] sm:$0xff]
    %v90 = vld [vmem:[#allocation8 + $0x10] sm:$0xff]
    %v91 = vld [vmem:[#allocation8 + $0x18] sm:$0xff]
    %v92 = vld [vmem:[#allocation8 + $0x20] sm:$0xff]
    %v93 = vld [vmem:[#allocation8 + $0x28] sm:$0xff]
    %v94 = vld [vmem:[#allocation8 + $0x30] sm:$0xff]
    %v95 = vld [vmem:[#allocation8 + $0x38] sm:$0xff]
    %v96 = vld [vmem:[#allocation8 + $0x40] sm:$0xff]
    %v97 = vld [vmem:[#allocation8 + $0x48] sm:$0xff]
    %v98 = vld [vmem:[#allocation8 + $0x50] sm:$0xff]
    %v99 = vld [vmem:[#allocation8 + $0x58] sm:$0xff]
    %v100 = vld [vmem:[#allocation8 + $0x60] sm:$0xff]
    %v101 = vld [vmem:[#allocation8 + $0x68] sm:$0xff]
    %v102 = vld [vmem:[#allocation8 + $0x70] sm:$0xff]
    %v103 = vld [vmem:[#allocation8 + $0x78] sm:$0xff]
    %v104 = vld [vmem:[#allocation8 + $0x80] sm:$0xff]
    %v105 = vld [vmem:[#allocation8 + $0x88] sm:$0xff]
    %v106 = vld [vmem:[#allocation8 + $0x90] sm:$0xff]
    %v107 = vld [vmem:[#allocation8 + $0x98] sm:$0xff]
    %v108 = vld [vmem:[#allocation8 + $0xa0] sm:$0xff]
    %v109 = vld [vmem:[#allocation8 + $0xa8] sm:$0xff]
    %v110 = vld [vmem:[#allocation8 + $0xb0] sm:$0xff]
    %v111 = vld [vmem:[#allocation8 + $0xb8] sm:$0xff]
    %v112 = vld [vmem:[#allocation8 + $0xc0] sm:$0xff]
    %v113 = vld [vmem:[#allocation8 + $0xc8] sm:$0xff]
    %v114 = vld [vmem:[#allocation8 + $0xd0] sm:$0xff]
    %v115 = vld [vmem:[#allocation8 + $0xd8] sm:$0xff]
    %v116 = vld [vmem:[#allocation8 + $0xe0] sm:$0xff]
    %v117 = vld [vmem:[#allocation8 + $0xe8] sm:$0xff]
    %v118 = vld [vmem:[#allocation8 + $0xf0] sm:$0xff]
    %v119 = vld [vmem:[#allocation8 + $0xf8] sm:$0xff]
    %v120 = vld [vmem:[%s3] sm:$0xf]
    %v122 = vlaneseq
    %v123 = vshrl.u32 %v122, 7
    %v124 = vsub.s32 0, %v123
    %v125 = vrot.slane %v120, %v124
    %v126 = vlaneseq
    %v127 = vshrl.u32 %v126, 7
    %v128 = vsub.s32 1, %v127
    %v129 = vrot.slane %v120, %v128
    %v130 = vlaneseq
    %v131 = vshrl.u32 %v130, 7
    %v132 = vsub.s32 2, %v131
    %v133 = vrot.slane %v120, %v132
    %v134 = vlaneseq
    %v135 = vshrl.u32 %v134, 7
    %v136 = vsub.s32 3, %v135
    %v137 = vrot.slane %v120, %v136
    %v150 = vunpack.c.l.b16 %v80
    %v151 = vunpack.c.l.b16 %v81
    %v152 = vunpack.c.l.b16 %v82
    %v153 = vunpack.c.l.b16 %v83
    %v154 = vunpack.c.l.b16 %v84
    %v155 = vunpack.c.l.b16 %v85
    %v156 = vunpack.c.l.b16 %v86
    %v157 = vunpack.c.l.b16 %v87
    %v158 = vpack.c.b16 %v151, %v150
    %v159 = vpack.c.b16 %v153, %v152
    %v160 = vpack.c.b16 %v155, %v154
    %v161 = vpack.c.b16 %v157, %v156
    %v198 = vunpack.c.l.b16 %v88
    %v199 = vunpack.c.h.b16 %v88
    %v200 = vunpack.c.l.b16 %v89
    %v201 = vunpack.c.h.b16 %v89
    %v202 = vunpack.c.l.b16 %v90
    %v203 = vunpack.c.h.b16 %v90
    %v204 = vunpack.c.l.b16 %v91
    %v205 = vunpack.c.h.b16 %v91
    %v206 = vunpack.c.l.b16 %v92
    %v207 = vunpack.c.h.b16 %v92
    %v208 = vunpack.c.l.b16 %v93
    %v209 = vunpack.c.h.b16 %v93
    %v210 = vunpack.c.l.b16 %v94
    %v211 = vunpack.c.h.b16 %v94
    %v212 = vunpack.c.l.b16 %v95
    %v213 = vunpack.c.h.b16 %v95
    %v214 = vunpack.c.l.b16 %v96
    %v215 = vunpack.c.h.b16 %v96
    %v216 = vunpack.c.l.b16 %v97
    %v217 = vunpack.c.h.b16 %v97
    %v218 = vunpack.c.l.b16 %v98
    %v219 = vunpack.c.h.b16 %v98
    %v220 = vunpack.c.l.b16 %v99
    %v221 = vunpack.c.h.b16 %v99
    %v222 = vunpack.c.l.b16 %v100
    %v223 = vunpack.c.h.b16 %v100
    %v224 = vunpack.c.l.b16 %v101
    %v225 = vunpack.c.h.b16 %v101
    %v226 = vunpack.c.l.b16 %v102
    %v227 = vunpack.c.h.b16 %v102
    %v228 = vunpack.c.l.b16 %v103
    %v229 = vunpack.c.h.b16 %v103
    %v230 = vunpack.c.l.b16 %v104
    %v231 = vunpack.c.h.b16 %v104
    %v232 = vunpack.c.l.b16 %v105
    %v233 = vunpack.c.h.b16 %v105
    %v234 = vunpack.c.l.b16 %v106
    %v235 = vunpack.c.h.b16 %v106
    %v236 = vunpack.c.l.b16 %v107
    %v237 = vunpack.c.h.b16 %v107
    %v238 = vunpack.c.l.b16 %v108
    %v239 = vunpack.c.h.b16 %v108
    %v240 = vunpack.c.l.b16 %v109
    %v241 = vunpack.c.h.b16 %v109
    %v242 = vunpack.c.l.b16 %v110
    %v243 = vunpack.c.h.b16 %v110
    %v244 = vunpack.c.l.b16 %v111
    %v245 = vunpack.c.h.b16 %v111
    %v246 = vunpack.c.l.b16 %v112
    %v247 = vunpack.c.h.b16 %v112
    %v248 = vunpack.c.l.b16 %v113
    %v249 = vunpack.c.h.b16 %v113
    %v250 = vunpack.c.l.b16 %v114
    %v251 = vunpack.c.h.b16 %v114
    %v252 = vunpack.c.l.b16 %v115
    %v253 = vunpack.c.h.b16 %v115
    %v254 = vunpack.c.l.b16 %v116
    %v255 = vunpack.c.h.b16 %v116
    %v256 = vunpack.c.l.b16 %v117
    %v257 = vunpack.c.h.b16 %v117
    %v258 = vunpack.c.l.b16 %v118
    %v259 = vunpack.c.h.b16 %v118
    %v260 = vunpack.c.l.b16 %v119
    %v261 = vunpack.c.h.b16 %v119
    %v262 = vpack.c.b16 %v202, %v198
    %v263 = vpack.c.b16 %v203, %v199
    %v264 = vpack.c.b16 %v204, %v200
    %v265 = vpack.c.b16 %v205, %v201
    %v266 = vpack.c.b16 %v210, %v206
    %v267 = vpack.c.b16 %v211, %v207
    %v268 = vpack.c.b16 %v212, %v208
    %v269 = vpack.c.b16 %v213, %v209
    %v270 = vpack.c.b16 %v218, %v214
    %v271 = vpack.c.b16 %v219, %v215
    %v272 = vpack.c.b16 %v220, %v216
    %v273 = vpack.c.b16 %v221, %v217
    %v274 = vpack.c.b16 %v226, %v222
    %v275 = vpack.c.b16 %v227, %v223
    %v276 = vpack.c.b16 %v228, %v224
    %v277 = vpack.c.b16 %v229, %v225
    %v278 = vpack.c.b16 %v234, %v230
    %v279 = vpack.c.b16 %v235, %v231
    %v280 = vpack.c.b16 %v236, %v232
    %v281 = vpack.c.b16 %v237, %v233
    %v282 = vpack.c.b16 %v242, %v238
    %v283 = vpack.c.b16 %v243, %v239
    %v284 = vpack.c.b16 %v244, %v240
    %v285 = vpack.c.b16 %v245, %v241
    %v286 = vpack.c.b16 %v250, %v246
    %v287 = vpack.c.b16 %v251, %v247
    %v288 = vpack.c.b16 %v252, %v248
    %v289 = vpack.c.b16 %v253, %v249
    %v290 = vpack.c.b16 %v258, %v254
    %v291 = vpack.c.b16 %v259, %v255
    %v292 = vpack.c.b16 %v260, %v256
    %v293 = vpack.c.b16 %v261, %v257
    %326 = vmatprep.subr.bf16.mxu0 %v263
    %327 = vmatpush1.bf16.msra.mxu0 %v262
    %328 = vmatprep.subr.bf16.mxu0 %v267
    %329 = vmatpush1.bf16.msra.mxu0 %v266
    %330 = vmatprep.subr.bf16.mxu0 %v271
    %331 = vmatpush1.bf16.msra.mxu0 %v270
    %332 = vmatprep.subr.bf16.mxu0 %v275
    %333 = vmatpush1.bf16.msra.mxu0 %v274
    %334 = vmatprep.subr.bf16.mxu0 %v279
    %335 = vmatpush1.bf16.msra.mxu0 %v278
    %336 = vmatprep.subr.bf16.mxu0 %v283
    %337 = vmatpush1.bf16.msra.mxu0 %v282
    %338 = vmatprep.subr.bf16.mxu0 %v287
    %339 = vmatpush1.bf16.msra.mxu0 %v286
    %340 = vmatprep.subr.bf16.mxu0 %v291
    %341 = vmatpush1.bf16.msra.mxu0 %v290
    %342 = vmatprep.subr.bf16.mxu0 0
    %343 = vmatpush1.bf16.msra.mxu0 0
    %344 = vmatprep.subr.bf16.mxu0 0
    %345 = vmatpush1.bf16.msra.mxu0 0
    %346 = vmatprep.subr.bf16.mxu0 0
    %347 = vmatpush1.bf16.msra.mxu0 0
    %348 = vmatprep.subr.bf16.mxu0 0
    %349 = vmatpush1.bf16.msra.mxu0 0
    %350 = vmatprep.subr.bf16.mxu0 0
    %351 = vmatpush1.bf16.msra.mxu0 0
    %352 = vmatprep.subr.bf16.mxu0 0
    %353 = vmatpush1.bf16.msra.mxu0 0
    %354 = vmatprep.subr.bf16.mxu0 0
    %355 = vmatpush1.bf16.msra.mxu0 0
    %356 = vmatprep.subr.bf16.mxu0 0
    %357 = vmatpush1.bf16.msra.mxu0 0
    %358 = vmatprep.mubr.bf16.mxu0 0
    %359 = vmatmul.mubr.bf16.gmra.mrb[0].mxu0 %v158
    %v360 = vpop.f32.mrb[0].mxu0
    %v361 = vadd.f32 %v125, %v360
    %v362 = vpop.f32.mrb[0].mxu0
    %v363 = vadd.f32 %v129, %v362
    %v364 = vpop.f32.mrb[0].mxu0
    %v365 = vadd.f32 %v125, %v364
    %v366 = vpop.f32.mrb[0].mxu0
    %v367 = vadd.f32 %v129, %v366
    %368 = vmatprep.mubr.bf16.mxu0 0
    %369 = vmatmul.mubr.bf16.gmra.mrb[0].mxu0 %v159
    %v370 = vpop.f32.mrb[0].mxu0
    %v371 = vadd.f32 %v125, %v370
    %v372 = vpop.f32.mrb[0].mxu0
    %v373 = vadd.f32 %v129, %v372
    %v374 = vpop.f32.mrb[0].mxu0
    %v375 = vadd.f32 %v125, %v374
    %v376 = vpop.f32.mrb[0].mxu0
    %v377 = vadd.f32 %v129, %v376
    %378 = vmatprep.mubr.bf16.mxu0 0
    %379 = vmatmul.mubr.bf16.gmra.mrb[0].mxu0 %v160
    %v380 = vpop.f32.mrb[0].mxu0
    %v381 = vadd.f32 %v125, %v380
    %v382 = vpop.f32.mrb[0].mxu0
    %v383 = vadd.f32 %v129, %v382
    %v384 = vpop.f32.mrb[0].mxu0
    %v385 = vadd.f32 %v125, %v384
    %v386 = vpop.f32.mrb[0].mxu0
    %v387 = vadd.f32 %v129, %v386
    %388 = vmatprep.mubr.bf16.mxu0 0
    %389 = vmatmul.mubr.bf16.gmra.mrb[0].mxu0 %v161
    %v390 = vpop.f32.mrb[0].mxu0
    %v391 = vadd.f32 %v125, %v390
    %v392 = vpop.f32.mrb[0].mxu0
    %v393 = vadd.f32 %v129, %v392
    %v394 = vpop.f32.mrb[0].mxu0
    %v395 = vadd.f32 %v125, %v394
    %v396 = vpop.f32.mrb[0].mxu0
    %v397 = vadd.f32 %v129, %v396
    %398 = vdwg.mxu0
    %399 = vmatprep.subr.bf16.mxu0 %v265
    %400 = vmatpush1.bf16.msra.mxu0 %v264
    %401 = vmatprep.subr.bf16.mxu0 %v269
    %402 = vmatpush1.bf16.msra.mxu0 %v268
    %403 = vmatprep.subr.bf16.mxu0 %v273
    %404 = vmatpush1.bf16.msra.mxu0 %v272
    %405 = vmatprep.subr.bf16.mxu0 %v277
    %406 = vmatpush1.bf16.msra.mxu0 %v276
    %407 = vmatprep.subr.bf16.mxu0 %v281
    %408 = vmatpush1.bf16.msra.mxu0 %v280
    %409 = vmatprep.subr.bf16.mxu0 %v285
    %410 = vmatpush1.bf16.msra.mxu0 %v284
    %411 = vmatprep.subr.bf16.mxu0 %v289
    %412 = vmatpush1.bf16.msra.mxu0 %v288
    %413 = vmatprep.subr.bf16.mxu0 %v293
    %414 = vmatpush1.bf16.msra.mxu0 %v292
    %415 = vmatprep.subr.bf16.mxu0 0
    %416 = vmatpush1.bf16.msra.mxu0 0
    %417 = vmatprep.subr.bf16.mxu0 0
    %418 = vmatpush1.bf16.msra.mxu0 0
    %419 = vmatprep.subr.bf16.mxu0 0
    %420 = vmatpush1.bf16.msra.mxu0 0
    %421 = vmatprep.subr.bf16.mxu0 0
    %422 = vmatpush1.bf16.msra.mxu0 0
    %423 = vmatprep.subr.bf16.mxu0 0
    %424 = vmatpush1.bf16.msra.mxu0 0
    %425 = vmatprep.subr.bf16.mxu0 0
    %426 = vmatpush1.bf16.msra.mxu0 0
    %427 = vmatprep.subr.bf16.mxu0 0
    %428 = vmatpush1.bf16.msra.mxu0 0
    %429 = vmatprep.subr.bf16.mxu0 0
    %430 = vmatpush1.bf16.msra.mxu0 0
    %431 = vmatprep.mubr.bf16.mxu0 0
    %432 = vmatmul.mubr.bf16.gmra.mrb[0].mxu0 %v158
    %v433 = vpop.f32.mrb[0].mxu0
    %v434 = vadd.f32 %v133, %v433
    %v435 = vpop.f32.mrb[0].mxu0
    %v436 = vadd.f32 %v137, %v435
    %v437 = vpop.f32.mrb[0].mxu0
    %v438 = vadd.f32 %v133, %v437
    %v439 = vpop.f32.mrb[0].mxu0
    %v440 = vadd.f32 %v137, %v439
    %441 = vmatprep.mubr.bf16.mxu0 0
    %442 = vmatmul.mubr.bf16.gmra.mrb[0].mxu0 %v159
    %v443 = vpop.f32.mrb[0].mxu0
    %v444 = vadd.f32 %v133, %v443
    %v445 = vpop.f32.mrb[0].mxu0
    %v446 = vadd.f32 %v137, %v445
    %v447 = vpop.f32.mrb[0].mxu0
    %v448 = vadd.f32 %v133, %v447
    %v449 = vpop.f32.mrb[0].mxu0
    %v450 = vadd.f32 %v137, %v449
    %451 = vmatprep.mubr.bf16.mxu0 0
    %452 = vmatmul.mubr.bf16.gmra.mrb[0].mxu0 %v160
    %v453 = vpop.f32.mrb[0].mxu0
    %v454 = vadd.f32 %v133, %v453
    %v455 = vpop.f32.mrb[0].mxu0
    %v456 = vadd.f32 %v137, %v455
    %v457 = vpop.f32.mrb[0].mxu0
    %v458 = vadd.f32 %v133, %v457
    %v459 = vpop.f32.mrb[0].mxu0
    %v460 = vadd.f32 %v137, %v459
    %461 = vmatprep.mubr.bf16.mxu0 0
    %462 = vmatmul.mubr.bf16.gmra.mrb[0].mxu0 %v161
    %v463 = vpop.f32.mrb[0].mxu0
    %v464 = vadd.f32 %v133, %v463
    %v465 = vpop.f32.mrb[0].mxu0
    %v466 = vadd.f32 %v137, %v465
    %v467 = vpop.f32.mrb[0].mxu0
    %v468 = vadd.f32 %v133, %v467
    %v469 = vpop.f32.mrb[0].mxu0
    %v470 = vadd.f32 %v137, %v469
    %471 = vdwg.mxu0
    %472 = vst [vmem:[#allocation4] sm:$0xff] %v361
    %473 = vst [vmem:[#allocation4 + $0x8] sm:$0xff] %v363
    %474 = vst [vmem:[#allocation4 + $0x10] sm:$0xff] %v434
    %475 = vst [vmem:[#allocation4 + $0x18] sm:$0xff] %v436
    %476 = vst [vmem:[#allocation4 + $0x20] sm:$0xff] %v365
    %477 = vst [vmem:[#allocation4 + $0x28] sm:$0xff] %v367
    %478 = vst [vmem:[#allocation4 + $0x30] sm:$0xff] %v438
    %479 = vst [vmem:[#allocation4 + $0x38] sm:$0xff] %v440
    %480 = vst [vmem:[#allocation4 + $0x40] sm:$0xff] %v371
    %481 = vst [vmem:[#allocation4 + $0x48] sm:$0xff] %v373
    %482 = vst [vmem:[#allocation4 + $0x50] sm:$0xff] %v444
    %483 = vst [vmem:[#allocation4 + $0x58] sm:$0xff] %v446
    %484 = vst [vmem:[#allocation4 + $0x60] sm:$0xff] %v375
    %485 = vst [vmem:[#allocation4 + $0x68] sm:$0xff] %v377
    %486 = vst [vmem:[#allocation4 + $0x70] sm:$0xff] %v448
    %487 = vst [vmem:[#allocation4 + $0x78] sm:$0xff] %v450
    %488 = vst [vmem:[#allocation4 + $0x80] sm:$0xff] %v381
    %489 = vst [vmem:[#allocation4 + $0x88] sm:$0xff] %v383
    %490 = vst [vmem:[#allocation4 + $0x90] sm:$0xff] %v454
    %491 = vst [vmem:[#allocation4 + $0x98] sm:$0xff] %v456
    %492 = vst [vmem:[#allocation4 + $0xa0] sm:$0xff] %v385
    %493 = vst [vmem:[#allocation4 + $0xa8] sm:$0xff] %v387
    %494 = vst [vmem:[#allocation4 + $0xb0] sm:$0xff] %v458
    %495 = vst [vmem:[#allocation4 + $0xb8] sm:$0xff] %v460
    %496 = vst [vmem:[#allocation4 + $0xc0] sm:$0xff] %v391
    %497 = vst [vmem:[#allocation4 + $0xc8] sm:$0xff] %v393
    %498 = vst [vmem:[#allocation4 + $0xd0] sm:$0xff] %v464
    %499 = vst [vmem:[#allocation4 + $0xd8] sm:$0xff] %v466
    %500 = vst [vmem:[#allocation4 + $0xe0] sm:$0xff] %v395
    %501 = vst [vmem:[#allocation4 + $0xe8] sm:$0xff] %v397
    %502 = vst [vmem:[#allocation4 + $0xf0] sm:$0xff] %v468
    %503 = vst [vmem:[#allocation4 + $0xf8] sm:$0xff] %v470
    %v504 = vld [vmem:[#allocation10] sm:$0xff]
    %v505 = vld [vmem:[#allocation10 + $0x8] sm:$0xff]
    %v506 = vld [vmem:[#allocation10 + $0x10] sm:$0xff]
    %v507 = vld [vmem:[#allocation10 + $0x18] sm:$0xff]
    %v508 = vld [vmem:[#allocation10 + $0x20] sm:$0xff]
    %v509 = vld [vmem:[#allocation10 + $0x28] sm:$0xff]
    %v510 = vld [vmem:[#allocation10 + $0x30] sm:$0xff]
    %v511 = vld [vmem:[#allocation10 + $0x38] sm:$0xff]
    %v512 = vld [vmem:[#allocation10 + $0x40] sm:$0xff]
    %v513 = vld [vmem:[#allocation10 + $0x48] sm:$0xff]
    %v514 = vld [vmem:[#allocation10 + $0x50] sm:$0xff]
    %v515 = vld [vmem:[#allocation10 + $0x58] sm:$0xff]
    %v516 = vld [vmem:[#allocation10 + $0x60] sm:$0xff]
    %v517 = vld [vmem:[#allocation10 + $0x68] sm:$0xff]
    %v518 = vld [vmem:[#allocation10 + $0x70] sm:$0xff]
    %v519 = vld [vmem:[#allocation10 + $0x78] sm:$0xff]
    %v520 = vld [vmem:[#allocation10 + $0x80] sm:$0xff]
    %v521 = vld [vmem:[#allocation10 + $0x88] sm:$0xff]
    %v522 = vld [vmem:[#allocation10 + $0x90] sm:$0xff]
    %v523 = vld [vmem:[#allocation10 + $0x98] sm:$0xff]
    %v524 = vld [vmem:[#allocation10 + $0xa0] sm:$0xff]
    %v525 = vld [vmem:[#allocation10 + $0xa8] sm:$0xff]
    %v526 = vld [vmem:[#allocation10 + $0xb0] sm:$0xff]
    %v527 = vld [vmem:[#allocation10 + $0xb8] sm:$0xff]
    %v528 = vld [vmem:[#allocation10 + $0xc0] sm:$0xff]
    %v529 = vld [vmem:[#allocation10 + $0xc8] sm:$0xff]
    %v530 = vld [vmem:[#allocation10 + $0xd0] sm:$0xff]
    %v531 = vld [vmem:[#allocation10 + $0xd8] sm:$0xff]
    %v532 = vld [vmem:[#allocation10 + $0xe0] sm:$0xff]
    %v533 = vld [vmem:[#allocation10 + $0xe8] sm:$0xff]
    %v534 = vld [vmem:[#allocation10 + $0xf0] sm:$0xff]
    %v535 = vld [vmem:[#allocation10 + $0xf8] sm:$0xff]
    %536 = vst [vmem:[#allocation2] sm:$0xff] 0.0
    %537 = vst [vmem:[#allocation3] sm:$0xff] 0.0
    %v538 = vld [vmem:[#allocation4] sm:$0xff]
    %v539 = vld [vmem:[#allocation4 + $0x8] sm:$0xff]
    %v540 = vld [vmem:[#allocation4 + $0x10] sm:$0xff]
    %v541 = vld [vmem:[#allocation4 + $0x18] sm:$0xff]
    %v542 = vld [vmem:[#allocation2] sm:$0xff]
    %v543 = vpack.c.bf16 %v542, %v542
    %v576 = vunpack.c.l.b16 %v504
    %v577 = vunpack.c.h.b16 %v504
    %v578 = vunpack.c.l.b16 %v505
    %v579 = vunpack.c.h.b16 %v505
    %v580 = vunpack.c.l.b16 %v506
    %v581 = vunpack.c.h.b16 %v506
    %v582 = vunpack.c.l.b16 %v507
    %v583 = vunpack.c.h.b16 %v507
    %v584 = vunpack.c.l.b16 %v508
    %v585 = vunpack.c.h.b16 %v508
    %v586 = vunpack.c.l.b16 %v509
    %v587 = vunpack.c.h.b16 %v509
    %v588 = vunpack.c.l.b16 %v510
    %v589 = vunpack.c.h.b16 %v510
    %v590 = vunpack.c.l.b16 %v511
    %v591 = vunpack.c.h.b16 %v511
    %v592 = vunpack.c.l.b16 %v512
    %v593 = vunpack.c.h.b16 %v512
    %v594 = vunpack.c.l.b16 %v513
    %v595 = vunpack.c.h.b16 %v513
    %v596 = vunpack.c.l.b16 %v514
    %v597 = vunpack.c.h.b16 %v514
    %v598 = vunpack.c.l.b16 %v515
    %v599 = vunpack.c.h.b16 %v515
    %v600 = vunpack.c.l.b16 %v516
    %v601 = vunpack.c.h.b16 %v516
    %v602 = vunpack.c.l.b16 %v517
    %v603 = vunpack.c.h.b16 %v517
    %v604 = vunpack.c.l.b16 %v518
    %v605 = vunpack.c.h.b16 %v518
    %v606 = vunpack.c.l.b16 %v519
    %v607 = vunpack.c.h.b16 %v519
    %v608 = vunpack.c.l.b16 %v520
    %v609 = vunpack.c.h.b16 %v520
    %v610 = vunpack.c.l.b16 %v521
    %v611 = vunpack.c.h.b16 %v521
    %v612 = vunpack.c.l.b16 %v522
    %v613 = vunpack.c.h.b16 %v522
    %v614 = vunpack.c.l.b16 %v523
    %v615 = vunpack.c.h.b16 %v523
    %v616 = vunpack.c.l.b16 %v524
    %v617 = vunpack.c.h.b16 %v524
    %v618 = vunpack.c.l.b16 %v525
    %v619 = vunpack.c.h.b16 %v525
    %v620 = vunpack.c.l.b16 %v526
    %v621 = vunpack.c.h.b16 %v526
    %v622 = vunpack.c.l.b16 %v527
    %v623 = vunpack.c.h.b16 %v527
    %v624 = vunpack.c.l.b16 %v528
    %v625 = vunpack.c.h.b16 %v528
    %v626 = vunpack.c.l.b16 %v529
    %v627 = vunpack.c.h.b16 %v529
    %v628 = vunpack.c.l.b16 %v530
    %v629 = vunpack.c.h.b16 %v530
    %v630 = vunpack.c.l.b16 %v531
    %v631 = vunpack.c.h.b16 %v531
    %v632 = vunpack.c.l.b16 %v532
    %v633 = vunpack.c.h.b16 %v532
    %v634 = vunpack.c.l.b16 %v533
    %v635 = vunpack.c.h.b16 %v533
    %v636 = vunpack.c.l.b16 %v534
    %v637 = vunpack.c.h.b16 %v534
    %v638 = vunpack.c.l.b16 %v535
    %v639 = vunpack.c.h.b16 %v535
    %v640 = vpack.c.b16 %v580, %v576
    %v641 = vpack.c.b16 %v581, %v577
    %v642 = vpack.c.b16 %v582, %v578
    %v643 = vpack.c.b16 %v583, %v579
    %v644 = vpack.c.b16 %v588, %v584
    %v645 = vpack.c.b16 %v589, %v585
    %v646 = vpack.c.b16 %v590, %v586
    %v647 = vpack.c.b16 %v591, %v587
    %v648 = vpack.c.b16 %v596, %v592
    %v649 = vpack.c.b16 %v597, %v593
    %v650 = vpack.c.b16 %v598, %v594
    %v651 = vpack.c.b16 %v599, %v595
    %v652 = vpack.c.b16 %v604, %v600
    %v653 = vpack.c.b16 %v605, %v601
    %v654 = vpack.c.b16 %v606, %v602
    %v655 = vpack.c.b16 %v607, %v603
    %v656 = vpack.c.b16 %v612, %v608
    %v657 = vpack.c.b16 %v613, %v609
    %v658 = vpack.c.b16 %v614, %v610
    %v659 = vpack.c.b16 %v615, %v611
    %v660 = vpack.c.b16 %v620, %v616
    %v661 = vpack.c.b16 %v621, %v617
    %v662 = vpack.c.b16 %v622, %v618
    %v663 = vpack.c.b16 %v623, %v619
    %v664 = vpack.c.b16 %v628, %v624
    %v665 = vpack.c.b16 %v629, %v625
    %v666 = vpack.c.b16 %v630, %v626
    %v667 = vpack.c.b16 %v631, %v627
    %v668 = vpack.c.b16 %v636, %v632
    %v669 = vpack.c.b16 %v637, %v633
    %v670 = vpack.c.b16 %v638, %v634
    %v671 = vpack.c.b16 %v639, %v635
    %704 = vmatprep.subr.bf16.mxu0 %v641
    %705 = vmatpush1.bf16.msra.mxu0 %v640
    %706 = vmatprep.subr.bf16.mxu0 %v645
    %707 = vmatpush1.bf16.msra.mxu0 %v644
    %708 = vmatprep.subr.bf16.mxu0 %v649
    %709 = vmatpush1.bf16.msra.mxu0 %v648
    %710 = vmatprep.subr.bf16.mxu0 %v653
    %711 = vmatpush1.bf16.msra.mxu0 %v652
    %712 = vmatprep.subr.bf16.mxu0 %v657
    %713 = vmatpush1.bf16.msra.mxu0 %v656
    %714 = vmatprep.subr.bf16.mxu0 %v661
    %715 = vmatpush1.bf16.msra.mxu0 %v660
    %716 = vmatprep.subr.bf16.mxu0 %v665
    %717 = vmatpush1.bf16.msra.mxu0 %v664
    %718 = vmatprep.subr.bf16.mxu0 %v669
    %719 = vmatpush1.bf16.msra.mxu0 %v668
    %720 = vmatprep.subr.bf16.mxu0 0
    %721 = vmatpush1.bf16.msra.mxu0 0
    %722 = vmatprep.subr.bf16.mxu0 0
    %723 = vmatpush1.bf16.msra.mxu0 0
    %724 = vmatprep.subr.bf16.mxu0 0
    %725 = vmatpush1.bf16.msra.mxu0 0
    %726 = vmatprep.subr.bf16.mxu0 0
    %727 = vmatpush1.bf16.msra.mxu0 0
    %728 = vmatprep.subr.bf16.mxu0 0
    %729 = vmatpush1.bf16.msra.mxu0 0
    %730 = vmatprep.subr.bf16.mxu0 0
    %731 = vmatpush1.bf16.msra.mxu0 0
    %732 = vmatprep.subr.bf16.mxu0 0
    %733 = vmatpush1.bf16.msra.mxu0 0
    %734 = vmatprep.subr.bf16.mxu0 0
    %735 = vmatpush1.bf16.msra.mxu0 0
    %736 = vmatprep.mubr.bf16.mxu0 0
    %737 = vmatmul.mubr.bf16.gmra.mrb[0].mxu0 %v543
    %v738 = vpop.f32.mrb[0].mxu0
    %v739 = vadd.f32 0.0, %v738
    %v740 = vpop.f32.mrb[0].mxu0
    %v741 = vadd.f32 0.0, %v740
    %v742 = vpop.f32.mrb[0].mxu0
    %v743 = vpop.f32.mrb[0].mxu0
    %744 = vdwg.mxu0
    %745 = vmatprep.subr.bf16.mxu0 %v643
    %746 = vmatpush1.bf16.msra.mxu0 %v642
    %747 = vmatprep.subr.bf16.mxu0 %v647
    %748 = vmatpush1.bf16.msra.mxu0 %v646
    %749 = vmatprep.subr.bf16.mxu0 %v651
    %750 = vmatpush1.bf16.msra.mxu0 %v650
    %751 = vmatprep.subr.bf16.mxu0 %v655
    %752 = vmatpush1.bf16.msra.mxu0 %v654
    %753 = vmatprep.subr.bf16.mxu0 %v659
    %754 = vmatpush1.bf16.msra.mxu0 %v658
    %755 = vmatprep.subr.bf16.mxu0 %v663
    %756 = vmatpush1.bf16.msra.mxu0 %v662
    %757 = vmatprep.subr.bf16.mxu0 %v667
    %758 = vmatpush1.bf16.msra.mxu0 %v666
    %759 = vmatprep.subr.bf16.mxu0 %v671
    %760 = vmatpush1.bf16.msra.mxu0 %v670
    %761 = vmatprep.subr.bf16.mxu0 0
    %762 = vmatpush1.bf16.msra.mxu0 0
    %763 = vmatprep.subr.bf16.mxu0 0
    %764 = vmatpush1.bf16.msra.mxu0 0
    %765 = vmatprep.subr.bf16.mxu0 0
    %766 = vmatpush1.bf16.msra.mxu0 0
    %767 = vmatprep.subr.bf16.mxu0 0
    %768 = vmatpush1.bf16.msra.mxu0 0
    %769 = vmatprep.subr.bf16.mxu0 0
    %770 = vmatpush1.bf16.msra.mxu0 0
    %771 = vmatprep.subr.bf16.mxu0 0
    %772 = vmatpush1.bf16.msra.mxu0 0
    %773 = vmatprep.subr.bf16.mxu0 0
    %774 = vmatpush1.bf16.msra.mxu0 0
    %775 = vmatprep.subr.bf16.mxu0 0
    %776 = vmatpush1.bf16.msra.mxu0 0
    %777 = vmatprep.mubr.bf16.mxu0 0
    %778 = vmatmul.mubr.bf16.gmra.mrb[0].mxu0 %v543
    %v779 = vpop.f32.mrb[0].mxu0
    %v780 = vadd.f32 0.0, %v779
    %v781 = vpop.f32.mrb[0].mxu0
    %v782 = vadd.f32 0.0, %v781
    %v783 = vpop.f32.mrb[0].mxu0
    %v784 = vpop.f32.mrb[0].mxu0
    %785 = vdwg.mxu0
    %v786 = vadd.f32 %v538, %v739
    %v787 = vadd.f32 %v539, %v741
    %v788 = vadd.f32 %v540, %v780
    %v789 = vadd.f32 %v541, %v782
    %v790 = vxor.u32 %v786, 2147483648
    %v791 = vmul.f32 %v790, 1.442695
    %v792 = vpow.pop %v791
    %v793 = vadd.f32 %v792, 1.0
    %v794 = vrcp.pop %v793
    %v795 = vmul.f32 1.0, %v794
    %v796 = vxor.u32 %v787, 2147483648
    %v797 = vmul.f32 %v796, 1.442695
    %v798 = vpow.pop %v797
    %v799 = vadd.f32 %v798, 1.0
    %v800 = vrcp.pop %v799
    %v801 = vmul.f32 1.0, %v800
    %v802 = vtanh.pop %v788
    %v803 = vxor.u32 %v789, 2147483648
    %v804 = vmul.f32 %v803, 1.442695
    %v805 = vpow.pop %v804
    %v806 = vadd.f32 %v805, 1.0
    %v807 = vrcp.pop %v806
    %v808 = vmul.f32 1.0, %v807
    %v809 = vld [vmem:[#allocation3] sm:$0xff]
    %v810 = vmul.f32 %v801, %v809
    %v811 = vmul.f32 %v795, %v802
    %v812 = vadd.f32 %v810, %v811
    %v813 = vtanh.pop %v812
    %v814 = vmul.f32 %v808, %v813
    %815 = vst [vmem:[#allocation2] sm:$0xff] %v814
    %816 = vst [vmem:[#allocation3] sm:$0xff] %v812
    %s817 = scalar_lea.vmem [#allocation4], 32
    %v818 = vld [vmem:[%s817] sm:$0xff]
    %v819 = vld [vmem:[%s817 + $0x8] sm:$0xff]
    %v820 = vld [vmem:[%s817 + $0x10] sm:$0xff]
    %v821 = vld [vmem:[%s817 + $0x18] sm:$0xff]
    %v822 = vld [vmem:[#allocation2] sm:$0xff]
    %v823 = vpack.c.bf16 %v822, %v822
    %824 = vmatprep.subr.bf16.mxu0 %v641
    %825 = vmatpush1.bf16.msra.mxu0 %v640
    %826 = vmatprep.subr.bf16.mxu0 %v645
    %827 = vmatpush1.bf16.msra.mxu0 %v644
    %828 = vmatprep.subr.bf16.mxu0 %v649
    %829 = vmatpush1.bf16.msra.mxu0 %v648
    %830 = vmatprep.subr.bf16.mxu0 %v653
    %831 = vmatpush1.bf16.msra.mxu0 %v652
    %832 = vmatprep.subr.bf16.mxu0 %v657
    %833 = vmatpush1.bf16.msra.mxu0 %v656
    %834 = vmatprep.subr.bf16.mxu0 %v661
    %835 = vmatpush1.bf16.msra.mxu0 %v660
    %836 = vmatprep.subr.bf16.mxu0 %v665
    %837 = vmatpush1.bf16.msra.mxu0 %v664
    %838 = vmatprep.subr.bf16.mxu0 %v669
    %839 = vmatpush1.bf16.msra.mxu0 %v668
    %840 = vmatprep.subr.bf16.mxu0 0
    %841 = vmatpush1.bf16.msra.mxu0 0
    %842 = vmatprep.subr.bf16.mxu0 0
    %843 = vmatpush1.bf16.msra.mxu0 0
    %844 = vmatprep.subr.bf16.mxu0 0
    %845 = vmatpush1.bf16.msra.mxu0 0
    %846 = vmatprep.subr.bf16.mxu0 0
    %847 = vmatpush1.bf16.msra.mxu0 0
    %848 = vmatprep.subr.bf16.mxu0 0
    %849 = vmatpush1.bf16.msra.mxu0 0
    %850 = vmatprep.subr.bf16.mxu0 0
    %851 = vmatpush1.bf16.msra.mxu0 0
    %852 = vmatprep.subr.bf16.mxu0 0
    %853 = vmatpush1.bf16.msra.mxu0 0
    %854 = vmatprep.subr.bf16.mxu0 0
    %855 = vmatpush1.bf16.msra.mxu0 0
    %856 = vmatprep.mubr.bf16.mxu0 0
    %857 = vmatmul.mubr.bf16.gmra.mrb[0].mxu0 %v823
    %v858 = vpop.f32.mrb[0].mxu0
    %v859 = vadd.f32 0.0, %v858
    %v860 = vpop.f32.mrb[0].mxu0
    %v861 = vadd.f32 0.0, %v860
    %v862 = vpop.f32.mrb[0].mxu0
    %v863 = vpop.f32.mrb[0].mxu0
    %864 = vdwg.mxu0
    %865 = vmatprep.subr.bf16.mxu0 %v643
    %866 = vmatpush1.bf16.msra.mxu0 %v642
    %867 = vmatprep.subr.bf16.mxu0 %v647
    %868 = vmatpush1.bf16.msra.mxu0 %v646
    %869 = vmatprep.subr.bf16.mxu0 %v651
    %870 = vmatpush1.bf16.msra.mxu0 %v650
    %871 = vmatprep.subr.bf16.mxu0 %v655
    %872 = vmatpush1.bf16.msra.mxu0 %v654
    %873 = vmatprep.subr.bf16.mxu0 %v659
    %874 = vmatpush1.bf16.msra.mxu0 %v658
    %875 = vmatprep.subr.bf16.mxu0 %v663
    %876 = vmatpush1.bf16.msra.mxu0 %v662
    %877 = vmatprep.subr.bf16.mxu0 %v667
    %878 = vmatpush1.bf16.msra.mxu0 %v666
    %879 = vmatprep.subr.bf16.mxu0 %v671
    %880 = vmatpush1.bf16.msra.mxu0 %v670
    %881 = vmatprep.subr.bf16.mxu0 0
    %882 = vmatpush1.bf16.msra.mxu0 0
    %883 = vmatprep.subr.bf16.mxu0 0
    %884 = vmatpush1.bf16.msra.mxu0 0
    %885 = vmatprep.subr.bf16.mxu0 0
    %886 = vmatpush1.bf16.msra.mxu0 0
    %887 = vmatprep.subr.bf16.mxu0 0
    %888 = vmatpush1.bf16.msra.mxu0 0
    %889 = vmatprep.subr.bf16.mxu0 0
    %890 = vmatpush1.bf16.msra.mxu0 0
    %891 = vmatprep.subr.bf16.mxu0 0
    %892 = vmatpush1.bf16.msra.mxu0 0
    %893 = vmatprep.subr.bf16.mxu0 0
    %894 = vmatpush1.bf16.msra.mxu0 0
    %895 = vmatprep.subr.bf16.mxu0 0
    %896 = vmatpush1.bf16.msra.mxu0 0
    %897 = vmatprep.mubr.bf16.mxu0 0
    %898 = vmatmul.mubr.bf16.gmra.mrb[0].mxu0 %v823
    %v899 = vpop.f32.mrb[0].mxu0
    %v900 = vadd.f32 0.0, %v899
    %v901 = vpop.f32.mrb[0].mxu0
    %v902 = vadd.f32 0.0, %v901
    %v903 = vpop.f32.mrb[0].mxu0
    %v904 = vpop.f32.mrb[0].mxu0
    %905 = vdwg.mxu0
    %v906 = vadd.f32 %v818, %v859
    %v907 = vadd.f32 %v819, %v861
    %v908 = vadd.f32 %v820, %v900
    %v909 = vadd.f32 %v821, %v902
    %v910 = vxor.u32 %v906, 2147483648
    %v911 = vmul.f32 %v910, 1.442695
    %v912 = vpow.pop %v911
    %v913 = vadd.f32 %v912, 1.0
    %v914 = vrcp.pop %v913
    %v915 = vmul.f32 1.0, %v914
    %v916 = vxor.u32 %v907, 2147483648
    %v917 = vmul.f32 %v916, 1.442695
    %v918 = vpow.pop %v917
    %v919 = vadd.f32 %v918, 1.0
    %v920 = vrcp.pop %v919
    %v921 = vmul.f32 1.0, %v920
    %v922 = vtanh.pop %v908
    %v923 = vxor.u32 %v909, 2147483648
    %v924 = vmul.f32 %v923, 1.442695
    %v925 = vpow.pop %v924
    %v926 = vadd.f32 %v925, 1.0
    %v927 = vrcp.pop %v926
    %v928 = vmul.f32 1.0, %v927
    %v929 = vld [vmem:[#allocation3] sm:$0xff]
    %v930 = vmul.f32 %v921, %v929
    %v931 = vmul.f32 %v915, %v922
    %v932 = vadd.f32 %v930, %v931
    %v933 = vtanh.pop %v932
    %v934 = vmul.f32 %v928, %v933
    %935 = vst [vmem:[#allocation2] sm:$0xff] %v934
    %936 = vst [vmem:[#allocation3] sm:$0xff] %v932
    %s937 = scalar_lea.vmem [#allocation4], 64
    %v938 = vld [vmem:[%s937] sm:$0xff]
    %v939 = vld [vmem:[%s937 + $0x8] sm:$0xff]
    %v940 = vld [vmem:[%s937 + $0x10] sm:$0xff]
    %v941 = vld [vmem:[%s937 + $0x18] sm:$0xff]
    %v942 = vld [vmem:[#allocation2] sm:$0xff]
    %v943 = vpack.c.bf16 %v942, %v942
    %944 = vmatprep.subr.bf16.mxu0 %v641
    %945 = vmatpush1.bf16.msra.mxu0 %v640
    %946 = vmatprep.subr.bf16.mxu0 %v645
    %947 = vmatpush1.bf16.msra.mxu0 %v644
    %948 = vmatprep.subr.bf16.mxu0 %v649
    %949 = vmatpush1.bf16.msra.mxu0 %v648
    %950 = vmatprep.subr.bf16.mxu0 %v653
    %951 = vmatpush1.bf16.msra.mxu0 %v652
    %952 = vmatprep.subr.bf16.mxu0 %v657
    %953 = vmatpush1.bf16.msra.mxu0 %v656
    %954 = vmatprep.subr.bf16.mxu0 %v661
    %955 = vmatpush1.bf16.msra.mxu0 %v660
    %956 = vmatprep.subr.bf16.mxu0 %v665
    %957 = vmatpush1.bf16.msra.mxu0 %v664
    %958 = vmatprep.subr.bf16.mxu0 %v669
    %959 = vmatpush1.bf16.msra.mxu0 %v668
    %960 = vmatprep.subr.bf16.mxu0 0
    %961 = vmatpush1.bf16.msra.mxu0 0
    %962 = vmatprep.subr.bf16.mxu0 0
    %963 = vmatpush1.bf16.msra.mxu0 0
    %964 = vmatprep.subr.bf16.mxu0 0
    %965 = vmatpush1.bf16.msra.mxu0 0
    %966 = vmatprep.subr.bf16.mxu0 0
    %967 = vmatpush1.bf16.msra.mxu0 0
    %968 = vmatprep.subr.bf16.mxu0 0
    %969 = vmatpush1.bf16.msra.mxu0 0
    %970 = vmatprep.subr.bf16.mxu0 0
    %971 = vmatpush1.bf16.msra.mxu0 0
    %972 = vmatprep.subr.bf16.mxu0 0
    %973 = vmatpush1.bf16.msra.mxu0 0
    %974 = vmatprep.subr.bf16.mxu0 0
    %975 = vmatpush1.bf16.msra.mxu0 0
    %976 = vmatprep.mubr.bf16.mxu0 0
    %977 = vmatmul.mubr.bf16.gmra.mrb[0].mxu0 %v943
    %v978 = vpop.f32.mrb[0].mxu0
    %v979 = vadd.f32 0.0, %v978
    %v980 = vpop.f32.mrb[0].mxu0
    %v981 = vadd.f32 0.0, %v980
    %v982 = vpop.f32.mrb[0].mxu0
    %v983 = vpop.f32.mrb[0].mxu0
    %984 = vdwg.mxu0
    %985 = vmatprep.subr.bf16.mxu0 %v643
    %986 = vmatpush1.bf16.msra.mxu0 %v642
    %987 = vmatprep.subr.bf16.mxu0 %v647
    %988 = vmatpush1.bf16.msra.mxu0 %v646
    %989 = vmatprep.subr.bf16.mxu0 %v651
    %990 = vmatpush1.bf16.msra.mxu0 %v650
    %991 = vmatprep.subr.bf16.mxu0 %v655
    %992 = vmatpush1.bf16.msra.mxu0 %v654
    %993 = vmatprep.subr.bf16.mxu0 %v659
    %994 = vmatpush1.bf16.msra.mxu0 %v658
    %995 = vmatprep.subr.bf16.mxu0 %v663
    %996 = vmatpush1.bf16.msra.mxu0 %v662
    %997 = vmatprep.subr.bf16.mxu0 %v667
    %998 = vmatpush1.bf16.msra.mxu0 %v666
    %999 = vmatprep.subr.bf16.mxu0 %v671
    %1000 = vmatpush1.bf16.msra.mxu0 %v670
    %1001 = vmatprep.subr.bf16.mxu0 0
    %1002 = vmatpush1.bf16.msra.mxu0 0
    %1003 = vmatprep.subr.bf16.mxu0 0
    %1004 = vmatpush1.bf16.msra.mxu0 0
    %1005 = vmatprep.subr.bf16.mxu0 0
    %1006 = vmatpush1.bf16.msra.mxu0 0
    %1007 = vmatprep.subr.bf16.mxu0 0
    %1008 = vmatpush1.bf16.msra.mxu0 0
    %1009 = vmatprep.subr.bf16.mxu0 0
    %1010 = vmatpush1.bf16.msra.mxu0 0
    %1011 = vmatprep.subr.bf16.mxu0 0
    %1012 = vmatpush1.bf16.msra.mxu0 0
    %1013 = vmatprep.subr.bf16.mxu0 0
    %1014 = vmatpush1.bf16.msra.mxu0 0
    %1015 = vmatprep.subr.bf16.mxu0 0
    %1016 = vmatpush1.bf16.msra.mxu0 0
    %1017 = vmatprep.mubr.bf16.mxu0 0
    %1018 = vmatmul.mubr.bf16.gmra.mrb[0].mxu0 %v943
    %v1019 = vpop.f32.mrb[0].mxu0
    %v1020 = vadd.f32 0.0, %v1019
    %v1021 = vpop.f32.mrb[0].mxu0
    %v1022 = vadd.f32 0.0, %v1021
    %v1023 = vpop.f32.mrb[0].mxu0
    %v1024 = vpop.f32.mrb[0].mxu0
    %1025 = vdwg.mxu0
    %v1026 = vadd.f32 %v938, %v979
    %v1027 = vadd.f32 %v939, %v981
    %v1028 = vadd.f32 %v940, %v1020
    %v1029 = vadd.f32 %v941, %v1022
    %v1030 = vxor.u32 %v1026, 2147483648
    %v1031 = vmul.f32 %v1030, 1.442695
    %v1032 = vpow.pop %v1031
    %v1033 = vadd.f32 %v1032, 1.0
    %v1034 = vrcp.pop %v1033
    %v1035 = vmul.f32 1.0, %v1034
    %v1036 = vxor.u32 %v1027, 2147483648
    %v1037 = vmul.f32 %v1036, 1.442695
    %v1038 = vpow.pop %v1037
    %v1039 = vadd.f32 %v1038, 1.0
    %v1040 = vrcp.pop %v1039
    %v1041 = vmul.f32 1.0, %v1040
    %v1042 = vtanh.pop %v1028
    %v1043 = vxor.u32 %v1029, 2147483648
    %v1044 = vmul.f32 %v1043, 1.442695
    %v1045 = vpow.pop %v1044
    %v1046 = vadd.f32 %v1045, 1.0
    %v1047 = vrcp.pop %v1046
    %v1048 = vmul.f32 1.0, %v1047
    %v1049 = vld [vmem:[#allocation3] sm:$0xff]
    %v1050 = vmul.f32 %v1041, %v1049
    %v1051 = vmul.f32 %v1035, %v1042
    %v1052 = vadd.f32 %v1050, %v1051
    %v1053 = vtanh.pop %v1052
    %v1054 = vmul.f32 %v1048, %v1053
    %1055 = vst [vmem:[#allocation2] sm:$0xff] %v1054
    %1056 = vst [vmem:[#allocation3] sm:$0xff] %v1052
    %s1057 = scalar_lea.vmem [#allocation4], 96
    %v1058 = vld [vmem:[%s1057] sm:$0xff]
    %v1059 = vld [vmem:[%s1057 + $0x8] sm:$0xff]
    %v1060 = vld [vmem:[%s1057 + $0x10] sm:$0xff]
    %v1061 = vld [vmem:[%s1057 + $0x18] sm:$0xff]
    %v1062 = vld [vmem:[#allocation2] sm:$0xff]
    %v1063 = vpack.c.bf16 %v1062, %v1062
    %1064 = vmatprep.subr.bf16.mxu0 %v641
    %1065 = vmatpush1.bf16.msra.mxu0 %v640
    %1066 = vmatprep.subr.bf16.mxu0 %v645
    %1067 = vmatpush1.bf16.msra.mxu0 %v644
    %1068 = vmatprep.subr.bf16.mxu0 %v649
    %1069 = vmatpush1.bf16.msra.mxu0 %v648
    %1070 = vmatprep.subr.bf16.mxu0 %v653
    %1071 = vmatpush1.bf16.msra.mxu0 %v652
    %1072 = vmatprep.subr.bf16.mxu0 %v657
    %1073 = vmatpush1.bf16.msra.mxu0 %v656
    %1074 = vmatprep.subr.bf16.mxu0 %v661
    %1075 = vmatpush1.bf16.msra.mxu0 %v660
    %1076 = vmatprep.subr.bf16.mxu0 %v665
    %1077 = vmatpush1.bf16.msra.mxu0 %v664
    %1078 = vmatprep.subr.bf16.mxu0 %v669
    %1079 = vmatpush1.bf16.msra.mxu0 %v668
    %1080 = vmatprep.subr.bf16.mxu0 0
    %1081 = vmatpush1.bf16.msra.mxu0 0
    %1082 = vmatprep.subr.bf16.mxu0 0
    %1083 = vmatpush1.bf16.msra.mxu0 0
    %1084 = vmatprep.subr.bf16.mxu0 0
    %1085 = vmatpush1.bf16.msra.mxu0 0
    %1086 = vmatprep.subr.bf16.mxu0 0
    %1087 = vmatpush1.bf16.msra.mxu0 0
    %1088 = vmatprep.subr.bf16.mxu0 0
    %1089 = vmatpush1.bf16.msra.mxu0 0
    %1090 = vmatprep.subr.bf16.mxu0 0
    %1091 = vmatpush1.bf16.msra.mxu0 0
    %1092 = vmatprep.subr.bf16.mxu0 0
    %1093 = vmatpush1.bf16.msra.mxu0 0
    %1094 = vmatprep.subr.bf16.mxu0 0
    %1095 = vmatpush1.bf16.msra.mxu0 0
    %1096 = vmatprep.mubr.bf16.mxu0 0
    %1097 = vmatmul.mubr.bf16.gmra.mrb[0].mxu0 %v1063
    %v1098 = vpop.f32.mrb[0].mxu0
    %v1099 = vadd.f32 0.0, %v1098
    %v1100 = vpop.f32.mrb[0].mxu0
    %v1101 = vadd.f32 0.0, %v1100
    %v1102 = vpop.f32.mrb[0].mxu0
    %v1103 = vpop.f32.mrb[0].mxu0
    %1104 = vdwg.mxu0
    %1105 = vmatprep.subr.bf16.mxu0 %v643
    %1106 = vmatpush1.bf16.msra.mxu0 %v642
    %1107 = vmatprep.subr.bf16.mxu0 %v647
    %1108 = vmatpush1.bf16.msra.mxu0 %v646
    %1109 = vmatprep.subr.bf16.mxu0 %v651
    %1110 = vmatpush1.bf16.msra.mxu0 %v650
    %1111 = vmatprep.subr.bf16.mxu0 %v655
    %1112 = vmatpush1.bf16.msra.mxu0 %v654
    %1113 = vmatprep.subr.bf16.mxu0 %v659
    %1114 = vmatpush1.bf16.msra.mxu0 %v658
    %1115 = vmatprep.subr.bf16.mxu0 %v663
    %1116 = vmatpush1.bf16.msra.mxu0 %v662
    %1117 = vmatprep.subr.bf16.mxu0 %v667
    %1118 = vmatpush1.bf16.msra.mxu0 %v666
    %1119 = vmatprep.subr.bf16.mxu0 %v671
    %1120 = vmatpush1.bf16.msra.mxu0 %v670
    %1121 = vmatprep.subr.bf16.mxu0 0
    %1122 = vmatpush1.bf16.msra.mxu0 0
    %1123 = vmatprep.subr.bf16.mxu0 0
    %1124 = vmatpush1.bf16.msra.mxu0 0
    %1125 = vmatprep.subr.bf16.mxu0 0
    %1126 = vmatpush1.bf16.msra.mxu0 0
    %1127 = vmatprep.subr.bf16.mxu0 0
    %1128 = vmatpush1.bf16.msra.mxu0 0
    %1129 = vmatprep.subr.bf16.mxu0 0
    %1130 = vmatpush1.bf16.msra.mxu0 0
    %1131 = vmatprep.subr.bf16.mxu0 0
    %1132 = vmatpush1.bf16.msra.mxu0 0
    %1133 = vmatprep.subr.bf16.mxu0 0
    %1134 = vmatpush1.bf16.msra.mxu0 0
    %1135 = vmatprep.subr.bf16.mxu0 0
    %1136 = vmatpush1.bf16.msra.mxu0 0
    %1137 = vmatprep.mubr.bf16.mxu0 0
    %1138 = vmatmul.mubr.bf16.gmra.mrb[0].mxu0 %v1063
    %v1139 = vpop.f32.mrb[0].mxu0
    %v1140 = vadd.f32 0.0, %v1139
    %v1141 = vpop.f32.mrb[0].mxu0
    %v1142 = vadd.f32 0.0, %v1141
    %v1143 = vpop.f32.mrb[0].mxu0
    %v1144 = vpop.f32.mrb[0].mxu0
    %1145 = vdwg.mxu0
    %v1146 = vadd.f32 %v1058, %v1099
    %v1147 = vadd.f32 %v1059, %v1101
    %v1148 = vadd.f32 %v1060, %v1140
    %v1149 = vadd.f32 %v1061, %v1142
    %v1150 = vxor.u32 %v1146, 2147483648
    %v1151 = vmul.f32 %v1150, 1.442695
    %v1152 = vpow.pop %v1151
    %v1153 = vadd.f32 %v1152, 1.0
    %v1154 = vrcp.pop %v1153
    %v1155 = vmul.f32 1.0, %v1154
    %v1156 = vxor.u32 %v1147, 2147483648
    %v1157 = vmul.f32 %v1156, 1.442695
    %v1158 = vpow.pop %v1157
    %v1159 = vadd.f32 %v1158, 1.0
    %v1160 = vrcp.pop %v1159
    %v1161 = vmul.f32 1.0, %v1160
    %v1162 = vtanh.pop %v1148
    %v1163 = vxor.u32 %v1149, 2147483648
    %v1164 = vmul.f32 %v1163, 1.442695
    %v1165 = vpow.pop %v1164
    %v1166 = vadd.f32 %v1165, 1.0
    %v1167 = vrcp.pop %v1166
    %v1168 = vmul.f32 1.0, %v1167
    %v1169 = vld [vmem:[#allocation3] sm:$0xff]
    %v1170 = vmul.f32 %v1161, %v1169
    %v1171 = vmul.f32 %v1155, %v1162
    %v1172 = vadd.f32 %v1170, %v1171
    %v1173 = vtanh.pop %v1172
    %v1174 = vmul.f32 %v1168, %v1173
    %1175 = vst [vmem:[#allocation2] sm:$0xff] %v1174
    %1176 = vst [vmem:[#allocation3] sm:$0xff] %v1172
    %s1177 = scalar_lea.vmem [#allocation4], 128
    %v1178 = vld [vmem:[%s1177] sm:$0xff]
    %v1179 = vld [vmem:[%s1177 + $0x8] sm:$0xff]
    %v1180 = vld [vmem:[%s1177 + $0x10] sm:$0xff]
    %v1181 = vld [vmem:[%s1177 + $0x18] sm:$0xff]
    %v1182 = vld [vmem:[#allocation2] sm:$0xff]
    %v1183 = vpack.c.bf16 %v1182, %v1182
    %1184 = vmatprep.subr.bf16.mxu0 %v641
    %1185 = vmatpush1.bf16.msra.mxu0 %v640
    %1186 = vmatprep.subr.bf16.mxu0 %v645
    %1187 = vmatpush1.bf16.msra.mxu0 %v644
    %1188 = vmatprep.subr.bf16.mxu0 %v649
    %1189 = vmatpush1.bf16.msra.mxu0 %v648
    %1190 = vmatprep.subr.bf16.mxu0 %v653
    %1191 = vmatpush1.bf16.msra.mxu0 %v652
    %1192 = vmatprep.subr.bf16.mxu0 %v657
    %1193 = vmatpush1.bf16.msra.mxu0 %v656
    %1194 = vmatprep.subr.bf16.mxu0 %v661
    %1195 = vmatpush1.bf16.msra.mxu0 %v660
    %1196 = vmatprep.subr.bf16.mxu0 %v665
    %1197 = vmatpush1.bf16.msra.mxu0 %v664
    %1198 = vmatprep.subr.bf16.mxu0 %v669
    %1199 = vmatpush1.bf16.msra.mxu0 %v668
    %1200 = vmatprep.subr.bf16.mxu0 0
    %1201 = vmatpush1.bf16.msra.mxu0 0
    %1202 = vmatprep.subr.bf16.mxu0 0
    %1203 = vmatpush1.bf16.msra.mxu0 0
    %1204 = vmatprep.subr.bf16.mxu0 0
    %1205 = vmatpush1.bf16.msra.mxu0 0
    %1206 = vmatprep.subr.bf16.mxu0 0
    %1207 = vmatpush1.bf16.msra.mxu0 0
    %1208 = vmatprep.subr.bf16.mxu0 0
    %1209 = vmatpush1.bf16.msra.mxu0 0
    %1210 = vmatprep.subr.bf16.mxu0 0
    %1211 = vmatpush1.bf16.msra.mxu0 0
    %1212 = vmatprep.subr.bf16.mxu0 0
    %1213 = vmatpush1.bf16.msra.mxu0 0
    %1214 = vmatprep.subr.bf16.mxu0 0
    %1215 = vmatpush1.bf16.msra.mxu0 0
    %1216 = vmatprep.mubr.bf16.mxu0 0
    %1217 = vmatmul.mubr.bf16.gmra.mrb[0].mxu0 %v1183
    %v1218 = vpop.f32.mrb[0].mxu0
    %v1219 = vadd.f32 0.0, %v1218
    %v1220 = vpop.f32.mrb[0].mxu0
    %v1221 = vadd.f32 0.0, %v1220
    %v1222 = vpop.f32.mrb[0].mxu0
    %v1223 = vpop.f32.mrb[0].mxu0
    %1224 = vdwg.mxu0
    %1225 = vmatprep.subr.bf16.mxu0 %v643
    %1226 = vmatpush1.bf16.msra.mxu0 %v642
    %1227 = vmatprep.subr.bf16.mxu0 %v647
    %1228 = vmatpush1.bf16.msra.mxu0 %v646
    %1229 = vmatprep.subr.bf16.mxu0 %v651
    %1230 = vmatpush1.bf16.msra.mxu0 %v650
    %1231 = vmatprep.subr.bf16.mxu0 %v655
    %1232 = vmatpush1.bf16.msra.mxu0 %v654
    %1233 = vmatprep.subr.bf16.mxu0 %v659
    %1234 = vmatpush1.bf16.msra.mxu0 %v658
    %1235 = vmatprep.subr.bf16.mxu0 %v663
    %1236 = vmatpush1.bf16.msra.mxu0 %v662
    %1237 = vmatprep.subr.bf16.mxu0 %v667
    %1238 = vmatpush1.bf16.msra.mxu0 %v666
    %1239 = vmatprep.subr.bf16.mxu0 %v671
    %1240 = vmatpush1.bf16.msra.mxu0 %v670
    %1241 = vmatprep.subr.bf16.mxu0 0
    %1242 = vmatpush1.bf16.msra.mxu0 0
    %1243 = vmatprep.subr.bf16.mxu0 0
    %1244 = vmatpush1.bf16.msra.mxu0 0
    %1245 = vmatprep.subr.bf16.mxu0 0
    %1246 = vmatpush1.bf16.msra.mxu0 0
    %1247 = vmatprep.subr.bf16.mxu0 0
    %1248 = vmatpush1.bf16.msra.mxu0 0
    %1249 = vmatprep.subr.bf16.mxu0 0
    %1250 = vmatpush1.bf16.msra.mxu0 0
    %1251 = vmatprep.subr.bf16.mxu0 0
    %1252 = vmatpush1.bf16.msra.mxu0 0
    %1253 = vmatprep.subr.bf16.mxu0 0
    %1254 = vmatpush1.bf16.msra.mxu0 0
    %1255 = vmatprep.subr.bf16.mxu0 0
    %1256 = vmatpush1.bf16.msra.mxu0 0
    %1257 = vmatprep.mubr.bf16.mxu0 0
    %1258 = vmatmul.mubr.bf16.gmra.mrb[0].mxu0 %v1183
    %v1259 = vpop.f32.mrb[0].mxu0
    %v1260 = vadd.f32 0.0, %v1259
    %v1261 = vpop.f32.mrb[0].mxu0
    %v1262 = vadd.f32 0.0, %v1261
    %v1263 = vpop.f32.mrb[0].mxu0
    %v1264 = vpop.f32.mrb[0].mxu0
    %1265 = vdwg.mxu0
    %v1266 = vadd.f32 %v1178, %v1219
    %v1267 = vadd.f32 %v1179, %v1221
    %v1268 = vadd.f32 %v1180, %v1260
    %v1269 = vadd.f32 %v1181, %v1262
    %v1270 = vxor.u32 %v1266, 2147483648
    %v1271 = vmul.f32 %v1270, 1.442695
    %v1272 = vpow.pop %v1271
    %v1273 = vadd.f32 %v1272, 1.0
    %v1274 = vrcp.pop %v1273
    %v1275 = vmul.f32 1.0, %v1274
    %v1276 = vxor.u32 %v1267, 2147483648
    %v1277 = vmul.f32 %v1276, 1.442695
    %v1278 = vpow.pop %v1277
    %v1279 = vadd.f32 %v1278, 1.0
    %v1280 = vrcp.pop %v1279
    %v1281 = vmul.f32 1.0, %v1280
    %v1282 = vtanh.pop %v1268
    %v1283 = vxor.u32 %v1269, 2147483648
    %v1284 = vmul.f32 %v1283, 1.442695
    %v1285 = vpow.pop %v1284
    %v1286 = vadd.f32 %v1285, 1.0
    %v1287 = vrcp.pop %v1286
    %v1288 = vmul.f32 1.0, %v1287
    %v1289 = vld [vmem:[#allocation3] sm:$0xff]
    %v1290 = vmul.f32 %v1281, %v1289
    %v1291 = vmul.f32 %v1275, %v1282
    %v1292 = vadd.f32 %v1290, %v1291
    %v1293 = vtanh.pop %v1292
    %v1294 = vmul.f32 %v1288, %v1293
    %1295 = vst [vmem:[#allocation2] sm:$0xff] %v1294
    %1296 = vst [vmem:[#allocation3] sm:$0xff] %v1292
    %s1297 = scalar_lea.vmem [#allocation4], 160
    %v1298 = vld [vmem:[%s1297] sm:$0xff]
    %v1299 = vld [vmem:[%s1297 + $0x8] sm:$0xff]
    %v1300 = vld [vmem:[%s1297 + $0x10] sm:$0xff]
    %v1301 = vld [vmem:[%s1297 + $0x18] sm:$0xff]
    %v1302 = vld [vmem:[#allocation2] sm:$0xff]
    %v1303 = vpack.c.bf16 %v1302, %v1302
    %1304 = vmatprep.subr.bf16.mxu0 %v641
    %1305 = vmatpush1.bf16.msra.mxu0 %v640
    %1306 = vmatprep.subr.bf16.mxu0 %v645
    %1307 = vmatpush1.bf16.msra.mxu0 %v644
    %1308 = vmatprep.subr.bf16.mxu0 %v649
    %1309 = vmatpush1.bf16.msra.mxu0 %v648
    %1310 = vmatprep.subr.bf16.mxu0 %v653
    %1311 = vmatpush1.bf16.msra.mxu0 %v652
    %1312 = vmatprep.subr.bf16.mxu0 %v657
    %1313 = vmatpush1.bf16.msra.mxu0 %v656
    %1314 = vmatprep.subr.bf16.mxu0 %v661
    %1315 = vmatpush1.bf16.msra.mxu0 %v660
    %1316 = vmatprep.subr.bf16.mxu0 %v665
    %1317 = vmatpush1.bf16.msra.mxu0 %v664
    %1318 = vmatprep.subr.bf16.mxu0 %v669
    %1319 = vmatpush1.bf16.msra.mxu0 %v668
    %1320 = vmatprep.subr.bf16.mxu0 0
    %1321 = vmatpush1.bf16.msra.mxu0 0
    %1322 = vmatprep.subr.bf16.mxu0 0
    %1323 = vmatpush1.bf16.msra.mxu0 0
    %1324 = vmatprep.subr.bf16.mxu0 0
    %1325 = vmatpush1.bf16.msra.mxu0 0
    %1326 = vmatprep.subr.bf16.mxu0 0
    %1327 = vmatpush1.bf16.msra.mxu0 0
    %1328 = vmatprep.subr.bf16.mxu0 0
    %1329 = vmatpush1.bf16.msra.mxu0 0
    %1330 = vmatprep.subr.bf16.mxu0 0
    %1331 = vmatpush1.bf16.msra.mxu0 0
    %1332 = vmatprep.subr.bf16.mxu0 0
    %1333 = vmatpush1.bf16.msra.mxu0 0
    %1334 = vmatprep.subr.bf16.mxu0 0
    %1335 = vmatpush1.bf16.msra.mxu0 0
    %1336 = vmatprep.mubr.bf16.mxu0 0
    %1337 = vmatmul.mubr.bf16.gmra.mrb[0].mxu0 %v1303
    %v1338 = vpop.f32.mrb[0].mxu0
    %v1339 = vadd.f32 0.0, %v1338
    %v1340 = vpop.f32.mrb[0].mxu0
    %v1341 = vadd.f32 0.0, %v1340
    %v1342 = vpop.f32.mrb[0].mxu0
    %v1343 = vpop.f32.mrb[0].mxu0
    %1344 = vdwg.mxu0
    %1345 = vmatprep.subr.bf16.mxu0 %v643
    %1346 = vmatpush1.bf16.msra.mxu0 %v642
    %1347 = vmatprep.subr.bf16.mxu0 %v647
    %1348 = vmatpush1.bf16.msra.mxu0 %v646
    %1349 = vmatprep.subr.bf16.mxu0 %v651
    %1350 = vmatpush1.bf16.msra.mxu0 %v650
    %1351 = vmatprep.subr.bf16.mxu0 %v655
    %1352 = vmatpush1.bf16.msra.mxu0 %v654
    %1353 = vmatprep.subr.bf16.mxu0 %v659
    %1354 = vmatpush1.bf16.msra.mxu0 %v658
    %1355 = vmatprep.subr.bf16.mxu0 %v663
    %1356 = vmatpush1.bf16.msra.mxu0 %v662
    %1357 = vmatprep.subr.bf16.mxu0 %v667
    %1358 = vmatpush1.bf16.msra.mxu0 %v666
    %1359 = vmatprep.subr.bf16.mxu0 %v671
    %1360 = vmatpush1.bf16.msra.mxu0 %v670
    %1361 = vmatprep.subr.bf16.mxu0 0
    %1362 = vmatpush1.bf16.msra.mxu0 0
    %1363 = vmatprep.subr.bf16.mxu0 0
    %1364 = vmatpush1.bf16.msra.mxu0 0
    %1365 = vmatprep.subr.bf16.mxu0 0
    %1366 = vmatpush1.bf16.msra.mxu0 0
    %1367 = vmatprep.subr.bf16.mxu0 0
    %1368 = vmatpush1.bf16.msra.mxu0 0
    %1369 = vmatprep.subr.bf16.mxu0 0
    %1370 = vmatpush1.bf16.msra.mxu0 0
    %1371 = vmatprep.subr.bf16.mxu0 0
    %1372 = vmatpush1.bf16.msra.mxu0 0
    %1373 = vmatprep.subr.bf16.mxu0 0
    %1374 = vmatpush1.bf16.msra.mxu0 0
    %1375 = vmatprep.subr.bf16.mxu0 0
    %1376 = vmatpush1.bf16.msra.mxu0 0
    %1377 = vmatprep.mubr.bf16.mxu0 0
    %1378 = vmatmul.mubr.bf16.gmra.mrb[0].mxu0 %v1303
    %v1379 = vpop.f32.mrb[0].mxu0
    %v1380 = vadd.f32 0.0, %v1379
    %v1381 = vpop.f32.mrb[0].mxu0
    %v1382 = vadd.f32 0.0, %v1381
    %v1383 = vpop.f32.mrb[0].mxu0
    %v1384 = vpop.f32.mrb[0].mxu0
    %1385 = vdwg.mxu0
    %v1386 = vadd.f32 %v1298, %v1339
    %v1387 = vadd.f32 %v1299, %v1341
    %v1388 = vadd.f32 %v1300, %v1380
    %v1389 = vadd.f32 %v1301, %v1382
    %v1390 = vxor.u32 %v1386, 2147483648
    %v1391 = vmul.f32 %v1390, 1.442695
    %v1392 = vpow.pop %v1391
    %v1393 = vadd.f32 %v1392, 1.0
    %v1394 = vrcp.pop %v1393
    %v1395 = vmul.f32 1.0, %v1394
    %v1396 = vxor.u32 %v1387, 2147483648
    %v1397 = vmul.f32 %v1396, 1.442695
    %v1398 = vpow.pop %v1397
    %v1399 = vadd.f32 %v1398, 1.0
    %v1400 = vrcp.pop %v1399
    %v1401 = vmul.f32 1.0, %v1400
    %v1402 = vtanh.pop %v1388
    %v1403 = vxor.u32 %v1389, 2147483648
    %v1404 = vmul.f32 %v1403, 1.442695
    %v1405 = vpow.pop %v1404
    %v1406 = vadd.f32 %v1405, 1.0
    %v1407 = vrcp.pop %v1406
    %v1408 = vmul.f32 1.0, %v1407
    %v1409 = vld [vmem:[#allocation3] sm:$0xff]
    %v1410 = vmul.f32 %v1401, %v1409
    %v1411 = vmul.f32 %v1395, %v1402
    %v1412 = vadd.f32 %v1410, %v1411
    %v1413 = vtanh.pop %v1412
    %v1414 = vmul.f32 %v1408, %v1413
    %1415 = vst [vmem:[#allocation2] sm:$0xff] %v1414
    %1416 = vst [vmem:[#allocation3] sm:$0xff] %v1412
    %s1417 = scalar_lea.vmem [#allocation4], 192
    %v1418 = vld [vmem:[%s1417] sm:$0xff]
    %v1419 = vld [vmem:[%s1417 + $0x8] sm:$0xff]
    %v1420 = vld [vmem:[%s1417 + $0x10] sm:$0xff]
    %v1421 = vld [vmem:[%s1417 + $0x18] sm:$0xff]
    %v1422 = vld [vmem:[#allocation2] sm:$0xff]
    %v1423 = vpack.c.bf16 %v1422, %v1422
    %1424 = vmatprep.subr.bf16.mxu0 %v641
    %1425 = vmatpush1.bf16.msra.mxu0 %v640
    %1426 = vmatprep.subr.bf16.mxu0 %v645
    %1427 = vmatpush1.bf16.msra.mxu0 %v644
    %1428 = vmatprep.subr.bf16.mxu0 %v649
    %1429 = vmatpush1.bf16.msra.mxu0 %v648
    %1430 = vmatprep.subr.bf16.mxu0 %v653
    %1431 = vmatpush1.bf16.msra.mxu0 %v652
    %1432 = vmatprep.subr.bf16.mxu0 %v657
    %1433 = vmatpush1.bf16.msra.mxu0 %v656
    %1434 = vmatprep.subr.bf16.mxu0 %v661
    %1435 = vmatpush1.bf16.msra.mxu0 %v660
    %1436 = vmatprep.subr.bf16.mxu0 %v665
    %1437 = vmatpush1.bf16.msra.mxu0 %v664
    %1438 = vmatprep.subr.bf16.mxu0 %v669
    %1439 = vmatpush1.bf16.msra.mxu0 %v668
    %1440 = vmatprep.subr.bf16.mxu0 0
    %1441 = vmatpush1.bf16.msra.mxu0 0
    %1442 = vmatprep.subr.bf16.mxu0 0
    %1443 = vmatpush1.bf16.msra.mxu0 0
    %1444 = vmatprep.subr.bf16.mxu0 0
    %1445 = vmatpush1.bf16.msra.mxu0 0
    %1446 = vmatprep.subr.bf16.mxu0 0
    %1447 = vmatpush1.bf16.msra.mxu0 0
    %1448 = vmatprep.subr.bf16.mxu0 0
    %1449 = vmatpush1.bf16.msra.mxu0 0
    %1450 = vmatprep.subr.bf16.mxu0 0
    %1451 = vmatpush1.bf16.msra.mxu0 0
    %1452 = vmatprep.subr.bf16.mxu0 0
    %1453 = vmatpush1.bf16.msra.mxu0 0
    %1454 = vmatprep.subr.bf16.mxu0 0
    %1455 = vmatpush1.bf16.msra.mxu0 0
    %1456 = vmatprep.mubr.bf16.mxu0 0
    %1457 = vmatmul.mubr.bf16.gmra.mrb[0].mxu0 %v1423
    %v1458 = vpop.f32.mrb[0].mxu0
    %v1459 = vadd.f32 0.0, %v1458
    %v1460 = vpop.f32.mrb[0].mxu0
    %v1461 = vadd.f32 0.0, %v1460
    %v1462 = vpop.f32.mrb[0].mxu0
    %v1463 = vpop.f32.mrb[0].mxu0
    %1464 = vdwg.mxu0
    %1465 = vmatprep.subr.bf16.mxu0 %v643
    %1466 = vmatpush1.bf16.msra.mxu0 %v642
    %1467 = vmatprep.subr.bf16.mxu0 %v647
    %1468 = vmatpush1.bf16.msra.mxu0 %v646
    %1469 = vmatprep.subr.bf16.mxu0 %v651
    %1470 = vmatpush1.bf16.msra.mxu0 %v650
    %1471 = vmatprep.subr.bf16.mxu0 %v655
    %1472 = vmatpush1.bf16.msra.mxu0 %v654
    %1473 = vmatprep.subr.bf16.mxu0 %v659
    %1474 = vmatpush1.bf16.msra.mxu0 %v658
    %1475 = vmatprep.subr.bf16.mxu0 %v663
    %1476 = vmatpush1.bf16.msra.mxu0 %v662
    %1477 = vmatprep.subr.bf16.mxu0 %v667
    %1478 = vmatpush1.bf16.msra.mxu0 %v666
    %1479 = vmatprep.subr.bf16.mxu0 %v671
    %1480 = vmatpush1.bf16.msra.mxu0 %v670
    %1481 = vmatprep.subr.bf16.mxu0 0
    %1482 = vmatpush1.bf16.msra.mxu0 0
    %1483 = vmatprep.subr.bf16.mxu0 0
    %1484 = vmatpush1.bf16.msra.mxu0 0
    %1485 = vmatprep.subr.bf16.mxu0 0
    %1486 = vmatpush1.bf16.msra.mxu0 0
    %1487 = vmatprep.subr.bf16.mxu0 0
    %1488 = vmatpush1.bf16.msra.mxu0 0
    %1489 = vmatprep.subr.bf16.mxu0 0
    %1490 = vmatpush1.bf16.msra.mxu0 0
    %1491 = vmatprep.subr.bf16.mxu0 0
    %1492 = vmatpush1.bf16.msra.mxu0 0
    %1493 = vmatprep.subr.bf16.mxu0 0
    %1494 = vmatpush1.bf16.msra.mxu0 0
    %1495 = vmatprep.subr.bf16.mxu0 0
    %1496 = vmatpush1.bf16.msra.mxu0 0
    %1497 = vmatprep.mubr.bf16.mxu0 0
    %1498 = vmatmul.mubr.bf16.gmra.mrb[0].mxu0 %v1423
    %v1499 = vpop.f32.mrb[0].mxu0
    %v1500 = vadd.f32 0.0, %v1499
    %v1501 = vpop.f32.mrb[0].mxu0
    %v1502 = vadd.f32 0.0, %v1501
    %v1503 = vpop.f32.mrb[0].mxu0
    %v1504 = vpop.f32.mrb[0].mxu0
    %1505 = vdwg.mxu0
    %v1506 = vadd.f32 %v1418, %v1459
    %v1507 = vadd.f32 %v1419, %v1461
    %v1508 = vadd.f32 %v1420, %v1500
    %v1509 = vadd.f32 %v1421, %v1502
    %v1510 = vxor.u32 %v1506, 2147483648
    %v1511 = vmul.f32 %v1510, 1.442695
    %v1512 = vpow.pop %v1511
    %v1513 = vadd.f32 %v1512, 1.0
    %v1514 = vrcp.pop %v1513
    %v1515 = vmul.f32 1.0, %v1514
    %v1516 = vxor.u32 %v1507, 2147483648
    %v1517 = vmul.f32 %v1516, 1.442695
    %v1518 = vpow.pop %v1517
    %v1519 = vadd.f32 %v1518, 1.0
    %v1520 = vrcp.pop %v1519
    %v1521 = vmul.f32 1.0, %v1520
    %v1522 = vtanh.pop %v1508
    %v1523 = vxor.u32 %v1509, 2147483648
    %v1524 = vmul.f32 %v1523, 1.442695
    %v1525 = vpow.pop %v1524
    %v1526 = vadd.f32 %v1525, 1.0
    %v1527 = vrcp.pop %v1526
    %v1528 = vmul.f32 1.0, %v1527
    %v1529 = vld [vmem:[#allocation3] sm:$0xff]
    %v1530 = vmul.f32 %v1521, %v1529
    %v1531 = vmul.f32 %v1515, %v1522
    %v1532 = vadd.f32 %v1530, %v1531
    %v1533 = vtanh.pop %v1532
    %v1534 = vmul.f32 %v1528, %v1533
    %1535 = vst [vmem:[#allocation2] sm:$0xff] %v1534
    %1536 = vst [vmem:[#allocation3] sm:$0xff] %v1532
    %s1537 = scalar_lea.vmem [#allocation4], 224
    %v1538 = vld [vmem:[%s1537] sm:$0xff]
    %v1539 = vld [vmem:[%s1537 + $0x8] sm:$0xff]
    %v1540 = vld [vmem:[%s1537 + $0x10] sm:$0xff]
    %v1541 = vld [vmem:[%s1537 + $0x18] sm:$0xff]
    %v1542 = vld [vmem:[#allocation2] sm:$0xff]
    %v1543 = vpack.c.bf16 %v1542, %v1542
    %1544 = vmatprep.subr.bf16.mxu0 %v641
    %1545 = vmatpush1.bf16.msra.mxu0 %v640
    %1546 = vmatprep.subr.bf16.mxu0 %v645
    %1547 = vmatpush1.bf16.msra.mxu0 %v644
    %1548 = vmatprep.subr.bf16.mxu0 %v649
    %1549 = vmatpush1.bf16.msra.mxu0 %v648
    %1550 = vmatprep.subr.bf16.mxu0 %v653
    %1551 = vmatpush1.bf16.msra.mxu0 %v652
    %1552 = vmatprep.subr.bf16.mxu0 %v657
    %1553 = vmatpush1.bf16.msra.mxu0 %v656
    %1554 = vmatprep.subr.bf16.mxu0 %v661
    %1555 = vmatpush1.bf16.msra.mxu0 %v660
    %1556 = vmatprep.subr.bf16.mxu0 %v665
    %1557 = vmatpush1.bf16.msra.mxu0 %v664
    %1558 = vmatprep.subr.bf16.mxu0 %v669
    %1559 = vmatpush1.bf16.msra.mxu0 %v668
    %1560 = vmatprep.subr.bf16.mxu0 0
    %1561 = vmatpush1.bf16.msra.mxu0 0
    %1562 = vmatprep.subr.bf16.mxu0 0
    %1563 = vmatpush1.bf16.msra.mxu0 0
    %1564 = vmatprep.subr.bf16.mxu0 0
    %1565 = vmatpush1.bf16.msra.mxu0 0
    %1566 = vmatprep.subr.bf16.mxu0 0
    %1567 = vmatpush1.bf16.msra.mxu0 0
    %1568 = vmatprep.subr.bf16.mxu0 0
    %1569 = vmatpush1.bf16.msra.mxu0 0
    %1570 = vmatprep.subr.bf16.mxu0 0
    %1571 = vmatpush1.bf16.msra.mxu0 0
    %1572 = vmatprep.subr.bf16.mxu0 0
    %1573 = vmatpush1.bf16.msra.mxu0 0
    %1574 = vmatprep.subr.bf16.mxu0 0
    %1575 = vmatpush1.bf16.msra.mxu0 0
    %1576 = vmatprep.mubr.bf16.mxu0 0
    %1577 = vmatmul.mubr.bf16.gmra.mrb[0].mxu0 %v1543
    %v1578 = vpop.f32.mrb[0].mxu0
    %v1579 = vadd.f32 0.0, %v1578
    %v1580 = vpop.f32.mrb[0].mxu0
    %v1581 = vadd.f32 0.0, %v1580
    %v1582 = vpop.f32.mrb[0].mxu0
    %v1583 = vpop.f32.mrb[0].mxu0
    %1584 = vdwg.mxu0
    %1585 = vmatprep.subr.bf16.mxu0 %v643
    %1586 = vmatpush1.bf16.msra.mxu0 %v642
    %1587 = vmatprep.subr.bf16.mxu0 %v647
    %1588 = vmatpush1.bf16.msra.mxu0 %v646
    %1589 = vmatprep.subr.bf16.mxu0 %v651
    %1590 = vmatpush1.bf16.msra.mxu0 %v650
    %1591 = vmatprep.subr.bf16.mxu0 %v655
    %1592 = vmatpush1.bf16.msra.mxu0 %v654
    %1593 = vmatprep.subr.bf16.mxu0 %v659
    %1594 = vmatpush1.bf16.msra.mxu0 %v658
    %1595 = vmatprep.subr.bf16.mxu0 %v663
    %1596 = vmatpush1.bf16.msra.mxu0 %v662
    %1597 = vmatprep.subr.bf16.mxu0 %v667
    %1598 = vmatpush1.bf16.msra.mxu0 %v666
    %1599 = vmatprep.subr.bf16.mxu0 %v671
    %1600 = vmatpush1.bf16.msra.mxu0 %v670
    %1601 = vmatprep.subr.bf16.mxu0 0
    %1602 = vmatpush1.bf16.msra.mxu0 0
    %1603 = vmatprep.subr.bf16.mxu0 0
    %1604 = vmatpush1.bf16.msra.mxu0 0
    %1605 = vmatprep.subr.bf16.mxu0 0
    %1606 = vmatpush1.bf16.msra.mxu0 0
    %1607 = vmatprep.subr.bf16.mxu0 0
    %1608 = vmatpush1.bf16.msra.mxu0 0
    %1609 = vmatprep.subr.bf16.mxu0 0
    %1610 = vmatpush1.bf16.msra.mxu0 0
    %1611 = vmatprep.subr.bf16.mxu0 0
    %1612 = vmatpush1.bf16.msra.mxu0 0
    %1613 = vmatprep.subr.bf16.mxu0 0
    %1614 = vmatpush1.bf16.msra.mxu0 0
    %1615 = vmatprep.subr.bf16.mxu0 0
    %1616 = vmatpush1.bf16.msra.mxu0 0
    %1617 = vmatprep.mubr.bf16.mxu0 0
    %1618 = vmatmul.mubr.bf16.gmra.mrb[0].mxu0 %v1543
    %v1619 = vpop.f32.mrb[0].mxu0
    %v1620 = vadd.f32 0.0, %v1619
    %v1621 = vpop.f32.mrb[0].mxu0
    %v1622 = vadd.f32 0.0, %v1621
    %v1623 = vpop.f32.mrb[0].mxu0
    %v1624 = vpop.f32.mrb[0].mxu0
    %1625 = vdwg.mxu0
    %v1626 = vadd.f32 %v1538, %v1579
    %v1627 = vadd.f32 %v1539, %v1581
    %v1628 = vadd.f32 %v1540, %v1620
    %v1629 = vadd.f32 %v1541, %v1622
    %v1630 = vxor.u32 %v1626, 2147483648
    %v1631 = vmul.f32 %v1630, 1.442695
    %v1632 = vpow.pop %v1631
    %v1633 = vadd.f32 %v1632, 1.0
    %v1634 = vrcp.pop %v1633
    %v1635 = vmul.f32 1.0, %v1634
    %v1636 = vxor.u32 %v1627, 2147483648
    %v1637 = vmul.f32 %v1636, 1.442695
    %v1638 = vpow.pop %v1637
    %v1639 = vadd.f32 %v1638, 1.0
    %v1640 = vrcp.pop %v1639
    %v1641 = vmul.f32 1.0, %v1640
    %v1642 = vtanh.pop %v1628
    %v1643 = vxor.u32 %v1629, 2147483648
    %v1644 = vmul.f32 %v1643, 1.442695
    %v1645 = vpow.pop %v1644
    %v1646 = vadd.f32 %v1645, 1.0
    %v1647 = vrcp.pop %v1646
    %v1648 = vmul.f32 1.0, %v1647
    %v1649 = vld [vmem:[#allocation3] sm:$0xff]
    %v1650 = vmul.f32 %v1641, %v1649
    %v1651 = vmul.f32 %v1635, %v1642
    %v1652 = vadd.f32 %v1650, %v1651
    %v1653 = vtanh.pop %v1652
    %v1654 = vmul.f32 %v1648, %v1653
    %1655 = vst [vmem:[#allocation2] sm:$0xff] %v1654
    %1656 = vst [vmem:[#allocation3] sm:$0xff] %v1652
    %v1657 = vld [vmem:[#allocation2] sm:$0xff]
    %v1658 = vpack.c.bf16 %v1657, %v1657
    %v1659 = vld [vmem:[#allocation11] sm:$0xf]
    %v1660 = vld [vmem:[#allocation11 + $0x4] sm:$0xf]
    %v1661 = vld [vmem:[#allocation11 + $0x8] sm:$0xf]
    %v1662 = vld [vmem:[#allocation11 + $0xc] sm:$0xf]
    %v1663 = vld [vmem:[#allocation11 + $0x10] sm:$0xf]
    %v1664 = vld [vmem:[#allocation11 + $0x14] sm:$0xf]
    %v1665 = vld [vmem:[#allocation11 + $0x18] sm:$0xf]
    %v1666 = vld [vmem:[#allocation11 + $0x1c] sm:$0xf]
    %v1667 = vld [vmem:[#allocation11 + $0x20] sm:$0xf]
    %v1668 = vld [vmem:[#allocation11 + $0x24] sm:$0xf]
    %v1669 = vld [vmem:[#allocation11 + $0x28] sm:$0xf]
    %v1670 = vld [vmem:[#allocation11 + $0x2c] sm:$0xf]
    %v1671 = vld [vmem:[#allocation11 + $0x30] sm:$0xf]
    %v1672 = vld [vmem:[#allocation11 + $0x34] sm:$0xf]
    %v1673 = vld [vmem:[#allocation11 + $0x38] sm:$0xf]
    %v1674 = vld [vmem:[#allocation11 + $0x3c] sm:$0xf]
    %v1675 = vld [vmem:[%s5] sm:$0x1]
    %v1677 = vlaneseq
    %v1678 = vshrl.u32 %v1677, 7
    %v1679 = vsub.s32 0, %v1678
    %v1680 = vrot.slane %v1675, %v1679
    %v1698 = vunpack.c.l.b16 %v1659
    %v1699 = vunpack.c.l.b16 %v1660
    %v1700 = vunpack.c.l.b16 %v1661
    %v1701 = vunpack.c.l.b16 %v1662
    %v1702 = vunpack.c.l.b16 %v1663
    %v1703 = vunpack.c.l.b16 %v1664
    %v1704 = vunpack.c.l.b16 %v1665
    %v1705 = vunpack.c.l.b16 %v1666
    %v1706 = vunpack.c.l.b16 %v1667
    %v1707 = vunpack.c.l.b16 %v1668
    %v1708 = vunpack.c.l.b16 %v1669
    %v1709 = vunpack.c.l.b16 %v1670
    %v1710 = vunpack.c.l.b16 %v1671
    %v1711 = vunpack.c.l.b16 %v1672
    %v1712 = vunpack.c.l.b16 %v1673
    %v1713 = vunpack.c.l.b16 %v1674
    %v1714 = vpack.c.b16 %v1699, %v1698
    %v1715 = vpack.c.b16 %v1701, %v1700
    %v1716 = vpack.c.b16 %v1703, %v1702
    %v1717 = vpack.c.b16 %v1705, %v1704
    %v1718 = vpack.c.b16 %v1707, %v1706
    %v1719 = vpack.c.b16 %v1709, %v1708
    %v1720 = vpack.c.b16 %v1711, %v1710
    %v1721 = vpack.c.b16 %v1713, %v1712
    %1730 = vmatprep.subr.bf16.mxu0 0
    %1731 = vmatpush1.bf16.msra.mxu0 %v1714
    %1732 = vmatprep.subr.bf16.mxu0 0
    %1733 = vmatpush1.bf16.msra.mxu0 %v1715
    %1734 = vmatprep.subr.bf16.mxu0 0
    %1735 = vmatpush1.bf16.msra.mxu0 %v1716
    %1736 = vmatprep.subr.bf16.mxu0 0
    %1737 = vmatpush1.bf16.msra.mxu0 %v1717
    %1738 = vmatprep.subr.bf16.mxu0 0
    %1739 = vmatpush1.bf16.msra.mxu0 %v1718
    %1740 = vmatprep.subr.bf16.mxu0 0
    %1741 = vmatpush1.bf16.msra.mxu0 %v1719
    %1742 = vmatprep.subr.bf16.mxu0 0
    %1743 = vmatpush1.bf16.msra.mxu0 %v1720
    %1744 = vmatprep.subr.bf16.mxu0 0
    %1745 = vmatpush1.bf16.msra.mxu0 %v1721
    %1746 = vmatprep.subr.bf16.mxu0 0
    %1747 = vmatpush1.bf16.msra.mxu0 0
    %1748 = vmatprep.subr.bf16.mxu0 0
    %1749 = vmatpush1.bf16.msra.mxu0 0
    %1750 = vmatprep.subr.bf16.mxu0 0
    %1751 = vmatpush1.bf16.msra.mxu0 0
    %1752 = vmatprep.subr.bf16.mxu0 0
    %1753 = vmatpush1.bf16.msra.mxu0 0
    %1754 = vmatprep.subr.bf16.mxu0 0
    %1755 = vmatpush1.bf16.msra.mxu0 0
    %1756 = vmatprep.subr.bf16.mxu0 0
    %1757 = vmatpush1.bf16.msra.mxu0 0
    %1758 = vmatprep.subr.bf16.mxu0 0
    %1759 = vmatpush1.bf16.msra.mxu0 0
    %1760 = vmatprep.subr.bf16.mxu0 0
    %1761 = vmatpush1.bf16.msra.mxu0 0
    %1762 = vmatprep.mubr.bf16.mxu0 0
    %1763 = vmatmul.mubr.bf16.gmra.mrb[0].mxu0 %v1658
    %v1764 = vpop.f32.mrb[0].mxu0
    %v1765 = vadd.f32 %v1680, %v1764
    %v1766 = vpop.f32.mrb[0].mxu0
    %v1767 = vpop.f32.mrb[0].mxu0
    %v1768 = vpop.f32.mrb[0].mxu0
    %1769 = vdwg.mxu0
    %1770 = vst [vmem:[#allocation13] sm:$0xff] %v1765
    // Predicated region
    $region42: #{tpu_custom_call.1} parent=1 // pred_check
      _
    $region43: #{tpu_custom_call.1} parent=1 // pred_check_branch
      %1772 = sbr.rel (0) target = $region45
    $region44: #{tpu_custom_call.1} parent=1 // pred_region
      %s1774 = ssub.s32 128, 128
      %1775 = vsyncadd [#allocation7], %s1774
      %s1777 = sshll.u32 [#allocation13], 4
      %s1778 = int_to_ptr.vmem [resolvable:$true] %s1777
      %1780 = dma.vmem_to_hbm [thread:$0]  %s1778, 128, %s6, [#allocation7]
    $region45: #{tpu_custom_call.1} parent=1 // pred_fallthru
      _
    // Predicated region
    $region46: #{tpu_custom_call.1} parent=1 // pred_check
      _
    $region47: #{tpu_custom_call.1} parent=1 // pred_check_branch
      %1782 = sbr.rel (0) target = $region49
    $region48: #{tpu_custom_call.1} parent=1 // pred_region
      %1783 = dma.done [#allocation7], 128
    $region49: #{tpu_custom_call.1} parent=1 // pred_fallthru
      _
    %1784 = vsyncpa [#allocation6], 1
    %1785 = vsyncpa [#allocation9], 1
    %1786 = vsyncpa [#allocation12], 1
    %1787 = vsyncpa [#allocation7], 1

</llo_original>
